<compile_context>
chip_gen: v6e
topology: v6e:2x2x1
jax: 0.10.0
libtpu: 0.0.40
codegen_flags: <defaults>
</compile_context>

<pallas_src>
import math
from typing import List, NamedTuple

import jax
import jax.numpy as jnp
import numpy as np
from jax.experimental import pallas as pl
from jax.experimental.pallas import tpu as pltpu


LANE = 128  # TPU lane width; the kernel output is padded to this for dense vst.


def _padded_out(out_c: int) -> int:
    return pl.cdiv(out_c, LANE) * LANE


# ----------------------------- configuration -------------------------------


class BlockCfg(NamedTuple):
    dilation: int
    dual_head: bool


def build_block_cfgs(num_stacks: int, num_layers: int, dilated: bool = True) -> List[BlockCfg]:
    cfgs = []
    for stack_idx in range(num_stacks):
        stack_dual_head = stack_idx != num_stacks - 1
        for layer_idx in range(num_layers):
            dilation = 2 ** layer_idx if dilated else 1
            dual = layer_idx < num_layers - 1 or stack_dual_head
            cfgs.append(BlockCfg(dilation=dilation, dual_head=dual))
    return cfgs


# ----------------------------- parameters -----------------------------------


def init_params(key, in_c, out_c, hid, skip_c, ksize, cfgs, num_post):
    """Deterministic synthetic parameters (f32, channels-last layout):
    1x1 conv weights are (C_in, C_out); dilated conv weights are (K, C_in, C_out);
    biases are (1, C_out)."""

    def nxt():
        nonlocal key
        key, sub = jax.random.split(key)
        return sub

    def w(shape, fan_in):
        return jax.random.normal(nxt(), shape, jnp.float32) / math.sqrt(fan_in)

    def b(cout):
        return 0.01 * jax.random.normal(nxt(), (1, cout), jnp.float32)

    raw = {"w0": w((in_c, hid), in_c), "b0": b(hid), "layers": [], "post": []}

    for cfg in cfgs:
        layer = {
            "wg": w((ksize, hid, 2 * hid), hid * ksize),  # gated dilated conv
            "bg": b(2 * hid),
            "ws": w((hid, skip_c), hid),                  # skip 1x1 conv
            "bs": b(skip_c),
        }
        if cfg.dual_head:
            layer["wo"] = w((hid, hid), hid)              # output (residual) 1x1 conv
            layer["bo"] = b(hid)
        raw["layers"].append(layer)

    for layer_idx in range(num_post):
        cout = out_c if layer_idx == num_post - 1 else skip_c
        raw["post"].append((w((skip_c, cout), skip_c), b(cout)))

    return raw


def pack_params(raw, *, out_c, hid, skip_c, ksize, cfgs, num_post):
    """Kernel-side parameter packing: bf16 weights, fused tap / skip|residual
    weights, lane-padded final post-net layer. Biases stay f32."""
    bf16 = jnp.bfloat16
    out_pad = _padded_out(out_c)

    packed = [raw["w0"].astype(bf16), raw["b0"]]

    for cfg, layer in zip(cfgs, raw["layers"]):
        # Fuse the K taps into one (K*hid, 2*hid) weight.
        wg_flat = layer["wg"].reshape(ksize * hid, 2 * hid).astype(bf16)
        packed += [wg_flat, layer["bg"]]
        if cfg.dual_head:
            # Fuse skip and residual heads: one (hid, skip_c + hid) matmul.
            w_sr = jnp.concatenate([layer["ws"], layer["wo"]], axis=1).astype(bf16)
            b_sr = jnp.concatenate([layer["bs"], layer["bo"]], axis=1)
            packed += [w_sr, b_sr]
        else:
            packed += [layer["ws"].astype(bf16), layer["bs"]]

    for layer_idx, (wp, bp) in enumerate(raw["post"]):
        if layer_idx == num_post - 1:
            pad = out_pad - out_c
            wp = jnp.pad(wp, ((0, 0), (0, pad)))
            bp = jnp.pad(bp, ((0, 0), (0, pad)))
        packed += [wp.astype(bf16), bp]

    return packed


# ----------------------------- Pallas kernel --------------------------------


def make_wavenet_kernel(M, T, hid, skip_c, ksize, cfgs, num_post):
    bf16 = jnp.bfloat16

    def kernel(x_ref, *refs):
        o_ref = refs[-1]
        prm = refs[:-1]
        idx = 0

        def take():
            nonlocal idx
            r = prm[idx]
            idx += 1
            return r[...]

        # Per-row time index within its (folded) batch element.  Masks taps that
        # would otherwise read across batch boundaries of the flattened B*T axis
        # (and zero-pads the causal history of each sequence).
        t_local = jax.lax.broadcasted_iota(jnp.int32, (M, 1), 0) % T

        x = x_ref[...]                                            # (M, in_c) f32

        # causal_conv1d (1x1 conv == matmul per timestep)
        w0 = take()
        b0 = take()
        h = jnp.dot(x.astype(bf16), w0, preferred_element_type=jnp.float32) + b0  # (M, hid) f32

        skip_sum = jnp.zeros((M, skip_c), jnp.float32)

        for cfg in cfgs:
            wg = take()     # (K*hid, 2*hid) bf16  -- fused taps
            bg = take()     # (1, 2*hid)     f32
            w_sr = take()   # (hid, skip_c[+hid]) bf16 -- fused skip|residual heads
            b_sr = take()   # (1, skip_c[+hid])   f32

            # Stacked causal taps: tap k sees h delayed by (K-1-k)*dilation.
            # pltpu.roll runs on the XLU; wrapped / cross-batch rows are zeroed
            # by the t_local mask (matches left zero-padding of the causal conv).
            taps = []
            for k in range(ksize):
                shift = (ksize - 1 - k) * cfg.dilation
                if shift == 0:
                    taps.append(h)
                else:
                    h_s = pltpu.roll(h, shift, axis=0)
                    h_s = jnp.where(t_local >= shift, h_s, 0.0)
                    taps.append(h_s)
            h_stack = jnp.concatenate(taps, axis=1)               # (M, K*hid)

            # One MXU call per layer (contraction depth K*hid), bias folded in.
            z = jnp.dot(h_stack.astype(bf16), wg, preferred_element_type=jnp.float32) + bg
            gated = jnp.tanh(z[:, :hid]) * jax.nn.sigmoid(z[:, hid:])   # (M, hid) f32
            gb = gated.astype(bf16)

            # Fused skip (+ residual) heads in one matmul, then split.
            sr = jnp.dot(gb, w_sr, preferred_element_type=jnp.float32) + b_sr
            skip_sum = skip_sum + sr[:, :skip_c]
            if cfg.dual_head:
                # TODO(synk): audyn's ResidualConvBlock1d is assumed to use plain
                # `output_conv(gated) + residual` (no sqrt(0.5) scaling).
                h = sr[:, skip_c:] + h

        # post_net: ReLU -> 1x1 conv, num_post times (last layer lane-padded).
        y = skip_sum
        for _ in range(num_post):
            wp = take()
            bp = take()
            y = jnp.dot(jnp.maximum(y, 0.0).astype(bf16), wp,
                        preferred_element_type=jnp.float32) + bp

        o_ref[...] = y.astype(o_ref.dtype)   # (M, out_pad): lane-dense store

    return kernel


def wavenet_forward(x_nct, packed, *, out_c, hid, skip_c, ksize, cfgs, num_post):
    """x_nct: (B, in_channels, T) float32 -> (B, out_channels, T) float32."""
    B, in_c, T = x_nct.shape
    M = B * T
    out_pad = _padded_out(out_c)

    # Fold batch into the matmul M dimension (channels-last).
    x_flat = jnp.transpose(x_nct, (0, 2, 1)).reshape(M, in_c).astype(jnp.float32)

    kernel = make_wavenet_kernel(M, T, hid, skip_c, ksize, cfgs, num_post)

    in_specs = [pl.BlockSpec((M, in_c), lambda i: (0, 0))]
    for p in packed:
        nd = p.ndim
        in_specs.append(pl.BlockSpec(p.shape, (lambda nd_: (lambda i: (0,) * nd_))(nd)))
    out_spec = pl.BlockSpec((M, out_pad), lambda i: (0, 0))

    y_pad = pl.pallas_call(
        kernel,
        out_shape=jax.ShapeDtypeStruct((M, out_pad), jnp.float32),
        grid=(1,),
        in_specs=in_specs,
        out_specs=out_spec,
        compiler_params=pltpu.CompilerParams(
            dimension_semantics=("arbitrary",),
            vmem_limit_bytes=32 * 1024 * 1024,
        ),
    )(x_flat, *packed)

    # Slice the lane-padded output back to out_c in the XLA wrapper.
    y = y_pad[:, :out_c].reshape(B, T, out_c)
    return jnp.transpose(y, (0, 2, 1))


# ----------------------------- pure-JAX reference ---------------------------


def wavenet_reference(x_nct, raw, *, out_c, hid, skip_c, ksize, cfgs, num_post):
    """Module-structured reference (per-batch, pad-based causal shifts, separate
    skip/residual heads, unpadded output).  Matmul operands are cast to bf16 to
    mirror the kernel's MXU precision; everything else is f32."""
    bf16 = jnp.bfloat16
    B, in_c, T = x_nct.shape
    x = jnp.transpose(x_nct, (0, 2, 1)).astype(jnp.float32)  # (B, T, C)

    def mm(a, w):
        return jnp.matmul(a.astype(bf16), w.astype(bf16),
                          preferred_element_type=jnp.float32)

    h = mm(x, raw["w0"]) + raw["b0"]
    skip_sum = jnp.zeros((B, T, skip_c), jnp.float32)
    for cfg, layer in zip(cfgs, raw["layers"]):
        z = jnp.zeros((B, T, 2 * hid), jnp.float32) + layer["bg"]
        for k in range(ksize):
            shift = (ksize - 1 - k) * cfg.dilation
            h_s = jnp.pad(h, ((0, 0), (shift, 0), (0, 0)))[:, :T, :]
            z = z + mm(h_s, layer["wg"][k])
        gated = jnp.tanh(z[..., :hid]) * jax.nn.sigmoid(z[..., hid:])
        skip_sum = skip_sum + mm(gated, layer["ws"]) + layer["bs"]
        if cfg.dual_head:
            h = mm(gated, layer["wo"]) + layer["bo"] + h
    y = skip_sum
    for wp, bp in raw["post"]:
        y = mm(jnp.maximum(y, 0.0), wp) + bp
    return jnp.transpose(y, (0, 2, 1))


# ----------------------------- main ------------------------------------------


if __name__ == "__main__":
    # Small WaveNet configuration (no local/global conditioning, no upsample).
    B, T = 2, 16
    in_channels = 8
    out_channels = 8
    hidden_channels = 32
    skip_channels = 32
    num_layers = 3
    num_stacks = 2
    num_post_layers = 2
    kernel_size = 3

    cfgs = build_block_cfgs(num_stacks, num_layers, dilated=True)

    key = jax.random.PRNGKey(0)
    key, pkey, xkey = jax.random.split(key, 3)
    raw = init_params(
        pkey, in_channels, out_channels, hidden_channels, skip_channels,
        kernel_size, cfgs, num_post_layers,
    )
    packed = pack_params(
        raw, out_c=out_channels, hid=hidden_channels, skip_c=skip_channels,
        ksize=kernel_size, cfgs=cfgs, num_post=num_post_layers,
    )

    # Continuous float input (batch, in_channels, num_frames) -> transform_input is identity.
    x = jax.random.normal(xkey, (B, in_channels, T), jnp.float32)

    out = wavenet_forward(
        x, packed,
        out_c=out_channels, hid=hidden_channels, skip_c=skip_channels,
        ksize=kernel_size, cfgs=cfgs, num_post=num_post_layers,
    )
    out = jax.block_until_ready(out)

    ref = wavenet_reference(
        x, raw,
        out_c=out_channels, hid=hidden_channels, skip_c=skip_channels,
        ksize=kernel_size, cfgs=cfgs, num_post=num_post_layers,
    )
    ref = jax.block_until_ready(ref)

    assert out.shape == (B, out_channels, T), out.shape
    np.testing.assert_allclose(np.asarray(out), np.asarray(ref), rtol=5e-3, atol=5e-3)
    print("KERNEL_OK")
</pallas_src>

<mosaic_0001>
module attributes {stable_mosaic.version = 11 : i64} {
  func.func @kernel(%arg0: i32, %arg1: memref<32x8xf32, #tpu.memory_space<vmem>>, %arg2: memref<8x32xbf16, #tpu.memory_space<vmem>>, %arg3: memref<1x32xf32, #tpu.memory_space<vmem>>, %arg4: memref<96x64xbf16, #tpu.memory_space<vmem>>, %arg5: memref<1x64xf32, #tpu.memory_space<vmem>>, %arg6: memref<32x64xbf16, #tpu.memory_space<vmem>>, %arg7: memref<1x64xf32, #tpu.memory_space<vmem>>, %arg8: memref<96x64xbf16, #tpu.memory_space<vmem>>, %arg9: memref<1x64xf32, #tpu.memory_space<vmem>>, %arg10: memref<32x64xbf16, #tpu.memory_space<vmem>>, %arg11: memref<1x64xf32, #tpu.memory_space<vmem>>, %arg12: memref<96x64xbf16, #tpu.memory_space<vmem>>, %arg13: memref<1x64xf32, #tpu.memory_space<vmem>>, %arg14: memref<32x64xbf16, #tpu.memory_space<vmem>>, %arg15: memref<1x64xf32, #tpu.memory_space<vmem>>, %arg16: memref<96x64xbf16, #tpu.memory_space<vmem>>, %arg17: memref<1x64xf32, #tpu.memory_space<vmem>>, %arg18: memref<32x64xbf16, #tpu.memory_space<vmem>>, %arg19: memref<1x64xf32, #tpu.memory_space<vmem>>, %arg20: memref<96x64xbf16, #tpu.memory_space<vmem>>, %arg21: memref<1x64xf32, #tpu.memory_space<vmem>>, %arg22: memref<32x64xbf16, #tpu.memory_space<vmem>>, %arg23: memref<1x64xf32, #tpu.memory_space<vmem>>, %arg24: memref<96x64xbf16, #tpu.memory_space<vmem>>, %arg25: memref<1x64xf32, #tpu.memory_space<vmem>>, %arg26: memref<32x32xbf16, #tpu.memory_space<vmem>>, %arg27: memref<1x32xf32, #tpu.memory_space<vmem>>, %arg28: memref<32x32xbf16, #tpu.memory_space<vmem>>, %arg29: memref<1x32xf32, #tpu.memory_space<vmem>>, %arg30: memref<32x128xbf16, #tpu.memory_space<vmem>>, %arg31: memref<1x128xf32, #tpu.memory_space<vmem>>, %arg32: memref<32x128xf32, #tpu.memory_space<vmem>>) attributes {dimension_semantics = [#tpu.dimension_semantics<arbitrary>], iteration_bounds = array<i64: 1>, scalar_prefetch = 0 : i64, scratch_operands = 0 : i64, tpu.core_type = #tpu.core_type<tc>, window_params = [{pipeline_mode = #tpu.pipeline_mode<synchronous>, transform_indices = @transform_0, window_bounds = array<i64: 32, 8>}, {pipeline_mode = #tpu.pipeline_mode<synchronous>, transform_indices = @transform_1, window_bounds = array<i64: 8, 32>}, {pipeline_mode = #tpu.pipeline_mode<synchronous>, transform_indices = @transform_2, window_bounds = array<i64: 1, 32>}, {pipeline_mode = #tpu.pipeline_mode<synchronous>, transform_indices = @transform_3, window_bounds = array<i64: 96, 64>}, {pipeline_mode = #tpu.pipeline_mode<synchronous>, transform_indices = @transform_4, window_bounds = array<i64: 1, 64>}, {pipeline_mode = #tpu.pipeline_mode<synchronous>, transform_indices = @transform_5, window_bounds = array<i64: 32, 64>}, {pipeline_mode = #tpu.pipeline_mode<synchronous>, transform_indices = @transform_6, window_bounds = array<i64: 1, 64>}, {pipeline_mode = #tpu.pipeline_mode<synchronous>, transform_indices = @transform_7, window_bounds = array<i64: 96, 64>}, {pipeline_mode = #tpu.pipeline_mode<synchronous>, transform_indices = @transform_8, window_bounds = array<i64: 1, 64>}, {pipeline_mode = #tpu.pipeline_mode<synchronous>, transform_indices = @transform_9, window_bounds = array<i64: 32, 64>}, {pipeline_mode = #tpu.pipeline_mode<synchronous>, transform_indices = @transform_10, window_bounds = array<i64: 1, 64>}, {pipeline_mode = #tpu.pipeline_mode<synchronous>, transform_indices = @transform_11, window_bounds = array<i64: 96, 64>}, {pipeline_mode = #tpu.pipeline_mode<synchronous>, transform_indices = @transform_12, window_bounds = array<i64: 1, 64>}, {pipeline_mode = #tpu.pipeline_mode<synchronous>, transform_indices = @transform_13, window_bounds = array<i64: 32, 64>}, {pipeline_mode = #tpu.pipeline_mode<synchronous>, transform_indices = @transform_14, window_bounds = array<i64: 1, 64>}, {pipeline_mode = #tpu.pipeline_mode<synchronous>, transform_indices = @transform_15, window_bounds = array<i64: 96, 64>}, {pipeline_mode = #tpu.pipeline_mode<synchronous>, transform_indices = @transform_16, window_bounds = array<i64: 1, 64>}, {pipeline_mode = #tpu.pipeline_mode<synchronous>, transform_indices = @transform_17, window_bounds = array<i64: 32, 64>}, {pipeline_mode = #tpu.pipeline_mode<synchronous>, transform_indices = @transform_18, window_bounds = array<i64: 1, 64>}, {pipeline_mode = #tpu.pipeline_mode<synchronous>, transform_indices = @transform_19, window_bounds = array<i64: 96, 64>}, {pipeline_mode = #tpu.pipeline_mode<synchronous>, transform_indices = @transform_20, window_bounds = array<i64: 1, 64>}, {pipeline_mode = #tpu.pipeline_mode<synchronous>, transform_indices = @transform_21, window_bounds = array<i64: 32, 64>}, {pipeline_mode = #tpu.pipeline_mode<synchronous>, transform_indices = @transform_22, window_bounds = array<i64: 1, 64>}, {pipeline_mode = #tpu.pipeline_mode<synchronous>, transform_indices = @transform_23, window_bounds = array<i64: 96, 64>}, {pipeline_mode = #tpu.pipeline_mode<synchronous>, transform_indices = @transform_24, window_bounds = array<i64: 1, 64>}, {pipeline_mode = #tpu.pipeline_mode<synchronous>, transform_indices = @transform_25, window_bounds = array<i64: 32, 32>}, {pipeline_mode = #tpu.pipeline_mode<synchronous>, transform_indices = @transform_26, window_bounds = array<i64: 1, 32>}, {pipeline_mode = #tpu.pipeline_mode<synchronous>, transform_indices = @transform_27, window_bounds = array<i64: 32, 32>}, {pipeline_mode = #tpu.pipeline_mode<synchronous>, transform_indices = @transform_28, window_bounds = array<i64: 1, 32>}, {pipeline_mode = #tpu.pipeline_mode<synchronous>, transform_indices = @transform_29, window_bounds = array<i64: 32, 128>}, {pipeline_mode = #tpu.pipeline_mode<synchronous>, transform_indices = @transform_30, window_bounds = array<i64: 1, 128>}, {pipeline_mode = #tpu.pipeline_mode<synchronous>, transform_indices = @transform_31, window_bounds = array<i64: 32, 128>}]} {
    %0 = tpu.iota {dimensions = array<i32: 0>} : vector<32x1xi32>
    %c16_i32 = arith.constant 16 : i32
    %c0_i32 = arith.constant 0 : i32
    %1 = arith.cmpi eq, %c16_i32, %c0_i32 : i32
    %c1_i32 = arith.constant 1 : i32
    %2 = arith.select %1, %c1_i32, %c16_i32 : i32
    %3 = vector.broadcast %2 : i32 to vector<32x1xi32>
    %4 = arith.remsi %0, %3 : vector<32x1xi32>
    %c0_i32_0 = arith.constant 0 : i32
    %5 = vector.broadcast %c0_i32_0 : i32 to vector<32x1xi32>
    %6 = arith.cmpi ne, %4, %5 : vector<32x1xi32>
    %c0_i32_1 = arith.constant 0 : i32
    %7 = vector.broadcast %c0_i32_1 : i32 to vector<32x1xi32>
    %8 = arith.cmpi slt, %4, %7 : vector<32x1xi32>
    %c0_i32_2 = arith.constant 0 : i32
    %9 = arith.cmpi slt, %2, %c0_i32_2 : i32
    %10 = vector.broadcast %9 : i1 to vector<32x1xi1>
    %11 = vector.broadcast %10 : vector<32x1xi1> to vector<32x1xi1>
    %12 = arith.xori %8, %11 : vector<32x1xi1>
    %13 = arith.andi %12, %6 : vector<32x1xi1>
    %14 = vector.broadcast %2 : i32 to vector<32x1xi32>
    %15 = arith.addi %4, %14 : vector<32x1xi32>
    %16 = arith.select %13, %15, %4 : vector<32x1xi1>, vector<32x1xi32>
    %c0 = arith.constant 0 : index
    %c0_3 = arith.constant 0 : index
    %17 = vector.load %arg1[%c0, %c0_3] : memref<32x8xf32, #tpu.memory_space<vmem>>, vector<32x8xf32>
    %c0_4 = arith.constant 0 : index
    %c0_5 = arith.constant 0 : index
    %18 = vector.load %arg2[%c0_4, %c0_5] : memref<8x32xbf16, #tpu.memory_space<vmem>>, vector<8x32xbf16>
    %c0_6 = arith.constant 0 : index
    %c0_7 = arith.constant 0 : index
    %19 = vector.load %arg3[%c0_6, %c0_7] : memref<1x32xf32, #tpu.memory_space<vmem>>, vector<1x32xf32>
    %20 = arith.truncf %17 : vector<32x8xf32> to vector<32x8xbf16>
    %cst = arith.constant dense<0.000000e+00> : vector<32x32xf32>
    %21 = tpu.matmul %20, %18, %cst {dimension_numbers = #tpu.dot_dimension_numbers<[1], [0], [0], [1], [0, 0, 1, 1], [], []>} : vector<32x8xbf16>, vector<8x32xbf16>, vector<32x32xf32> -> vector<32x32xf32>
    %22 = vector.broadcast %19 : vector<1x32xf32> to vector<32x32xf32>
    %23 = arith.addf %21, %22 : vector<32x32xf32>
    %cst_8 = arith.constant 0.000000e+00 : f32
    %24 = vector.broadcast %cst_8 : f32 to vector<32x32xf32>
    %c0_9 = arith.constant 0 : index
    %c0_10 = arith.constant 0 : index
    %25 = vector.load %arg4[%c0_9, %c0_10] : memref<96x64xbf16, #tpu.memory_space<vmem>>, vector<96x64xbf16>
    %c0_11 = arith.constant 0 : index
    %c0_12 = arith.constant 0 : index
    %26 = vector.load %arg5[%c0_11, %c0_12] : memref<1x64xf32, #tpu.memory_space<vmem>>, vector<1x64xf32>
    %c0_13 = arith.constant 0 : index
    %c0_14 = arith.constant 0 : index
    %27 = vector.load %arg6[%c0_13, %c0_14] : memref<32x64xbf16, #tpu.memory_space<vmem>>, vector<32x64xbf16>
    %c0_15 = arith.constant 0 : index
    %c0_16 = arith.constant 0 : index
    %28 = vector.load %arg7[%c0_15, %c0_16] : memref<1x64xf32, #tpu.memory_space<vmem>>, vector<1x64xf32>
    %c2_i32 = arith.constant 2 : i32
    %29 = tpu.dynamic_rotate %23 by %c2_i32 dim 0 : vector<32x32xf32>, i32 -> vector<32x32xf32>
    %c2_i32_17 = arith.constant 2 : i32
    %30 = vector.broadcast %c2_i32_17 : i32 to vector<32x1xi32>
    %31 = arith.cmpi sge, %16, %30 : vector<32x1xi32>
    %cst_18 = arith.constant 0.000000e+00 : f32
    %32 = vector.shape_cast %31 : vector<32x1xi1> to vector<32x1xi1>
    %33 = vector.broadcast %32 : vector<32x1xi1> to vector<32x32xi1>
    %34 = vector.broadcast %cst_18 : f32 to vector<32x32xf32>
    %35 = arith.select %33, %29, %34 : vector<32x32xi1>, vector<32x32xf32>
    %c1_i32_19 = arith.constant 1 : i32
    %36 = tpu.dynamic_rotate %23 by %c1_i32_19 dim 0 : vector<32x32xf32>, i32 -> vector<32x32xf32>
    %c1_i32_20 = arith.constant 1 : i32
    %37 = vector.broadcast %c1_i32_20 : i32 to vector<32x1xi32>
    %38 = arith.cmpi sge, %16, %37 : vector<32x1xi32>
    %cst_21 = arith.constant 0.000000e+00 : f32
    %39 = vector.shape_cast %38 : vector<32x1xi1> to vector<32x1xi1>
    %40 = vector.broadcast %39 : vector<32x1xi1> to vector<32x32xi1>
    %41 = vector.broadcast %cst_21 : f32 to vector<32x32xf32>
    %42 = arith.select %40, %36, %41 : vector<32x32xi1>, vector<32x32xf32>
    %43 = tpu.concatenate %35, %42, %23 in 1 : vector<32x32xf32>, vector<32x32xf32>, vector<32x32xf32> -> vector<32x96xf32>
    %44 = arith.truncf %43 : vector<32x96xf32> to vector<32x96xbf16>
    %cst_22 = arith.constant dense<0.000000e+00> : vector<32x64xf32>
    %45 = tpu.matmul %44, %25, %cst_22 {dimension_numbers = #tpu.dot_dimension_numbers<[1], [0], [0], [1], [0, 0, 1, 1], [], []>} : vector<32x96xbf16>, vector<96x64xbf16>, vector<32x64xf32> -> vector<32x64xf32>
    %46 = vector.broadcast %26 : vector<1x64xf32> to vector<32x64xf32>
    %47 = arith.addf %45, %46 : vector<32x64xf32>
    %48 = vector.extract_strided_slice %47 {offsets = [0, 0], sizes = [32, 32], strides = [1, 1]} : vector<32x64xf32> to vector<32x32xf32>
    %49 = math.tanh %48 : vector<32x32xf32>
    %50 = vector.extract_strided_slice %47 {offsets = [0, 32], sizes = [32, 32], strides = [1, 1]} : vector<32x64xf32> to vector<32x32xf32>
    %51 = arith.negf %50 : vector<32x32xf32>
    %52 = math.exp %51 : vector<32x32xf32>
    %cst_23 = arith.constant 1.000000e+00 : f32
    %53 = vector.broadcast %cst_23 : f32 to vector<32x32xf32>
    %54 = arith.addf %53, %52 : vector<32x32xf32>
    %55 = arith.divf %53, %54 : vector<32x32xf32>
    %56 = arith.mulf %49, %55 : vector<32x32xf32>
    %57 = arith.truncf %56 : vector<32x32xf32> to vector<32x32xbf16>
    %cst_24 = arith.constant dense<0.000000e+00> : vector<32x64xf32>
    %58 = tpu.matmul %57, %27, %cst_24 {dimension_numbers = #tpu.dot_dimension_numbers<[1], [0], [0], [1], [0, 0, 1, 1], [], []>} : vector<32x32xbf16>, vector<32x64xbf16>, vector<32x64xf32> -> vector<32x64xf32>
    %59 = vector.broadcast %28 : vector<1x64xf32> to vector<32x64xf32>
    %60 = arith.addf %58, %59 : vector<32x64xf32>
    %61 = vector.extract_strided_slice %60 {offsets = [0, 0], sizes = [32, 32], strides = [1, 1]} : vector<32x64xf32> to vector<32x32xf32>
    %62 = arith.addf %24, %61 : vector<32x32xf32>
    %63 = vector.extract_strided_slice %60 {offsets = [0, 32], sizes = [32, 32], strides = [1, 1]} : vector<32x64xf32> to vector<32x32xf32>
    %64 = arith.addf %63, %23 : vector<32x32xf32>
    %c0_25 = arith.constant 0 : index
    %c0_26 = arith.constant 0 : index
    %65 = vector.load %arg8[%c0_25, %c0_26] : memref<96x64xbf16, #tpu.memory_space<vmem>>, vector<96x64xbf16>
    %c0_27 = arith.constant 0 : index
    %c0_28 = arith.constant 0 : index
    %66 = vector.load %arg9[%c0_27, %c0_28] : memref<1x64xf32, #tpu.memory_space<vmem>>, vector<1x64xf32>
    %c0_29 = arith.constant 0 : index
    %c0_30 = arith.constant 0 : index
    %67 = vector.load %arg10[%c0_29, %c0_30] : memref<32x64xbf16, #tpu.memory_space<vmem>>, vector<32x64xbf16>
    %c0_31 = arith.constant 0 : index
    %c0_32 = arith.constant 0 : index
    %68 = vector.load %arg11[%c0_31, %c0_32] : memref<1x64xf32, #tpu.memory_space<vmem>>, vector<1x64xf32>
    %c4_i32 = arith.constant 4 : i32
    %69 = tpu.dynamic_rotate %64 by %c4_i32 dim 0 : vector<32x32xf32>, i32 -> vector<32x32xf32>
    %c4_i32_33 = arith.constant 4 : i32
    %70 = vector.broadcast %c4_i32_33 : i32 to vector<32x1xi32>
    %71 = arith.cmpi sge, %16, %70 : vector<32x1xi32>
    %cst_34 = arith.constant 0.000000e+00 : f32
    %72 = vector.shape_cast %71 : vector<32x1xi1> to vector<32x1xi1>
    %73 = vector.broadcast %72 : vector<32x1xi1> to vector<32x32xi1>
    %74 = vector.broadcast %cst_34 : f32 to vector<32x32xf32>
    %75 = arith.select %73, %69, %74 : vector<32x32xi1>, vector<32x32xf32>
    %c2_i32_35 = arith.constant 2 : i32
    %76 = tpu.dynamic_rotate %64 by %c2_i32_35 dim 0 : vector<32x32xf32>, i32 -> vector<32x32xf32>
    %c2_i32_36 = arith.constant 2 : i32
    %77 = vector.broadcast %c2_i32_36 : i32 to vector<32x1xi32>
    %78 = arith.cmpi sge, %16, %77 : vector<32x1xi32>
    %cst_37 = arith.constant 0.000000e+00 : f32
    %79 = vector.shape_cast %78 : vector<32x1xi1> to vector<32x1xi1>
    %80 = vector.broadcast %79 : vector<32x1xi1> to vector<32x32xi1>
    %81 = vector.broadcast %cst_37 : f32 to vector<32x32xf32>
    %82 = arith.select %80, %76, %81 : vector<32x32xi1>, vector<32x32xf32>
    %83 = tpu.concatenate %75, %82, %64 in 1 : vector<32x32xf32>, vector<32x32xf32>, vector<32x32xf32> -> vector<32x96xf32>
    %84 = arith.truncf %83 : vector<32x96xf32> to vector<32x96xbf16>
    %cst_38 = arith.constant dense<0.000000e+00> : vector<32x64xf32>
    %85 = tpu.matmul %84, %65, %cst_38 {dimension_numbers = #tpu.dot_dimension_numbers<[1], [0], [0], [1], [0, 0, 1, 1], [], []>} : vector<32x96xbf16>, vector<96x64xbf16>, vector<32x64xf32> -> vector<32x64xf32>
    %86 = vector.broadcast %66 : vector<1x64xf32> to vector<32x64xf32>
    %87 = arith.addf %85, %86 : vector<32x64xf32>
    %88 = vector.extract_strided_slice %87 {offsets = [0, 0], sizes = [32, 32], strides = [1, 1]} : vector<32x64xf32> to vector<32x32xf32>
    %89 = math.tanh %88 : vector<32x32xf32>
    %90 = vector.extract_strided_slice %87 {offsets = [0, 32], sizes = [32, 32], strides = [1, 1]} : vector<32x64xf32> to vector<32x32xf32>
    %91 = arith.negf %90 : vector<32x32xf32>
    %92 = math.exp %91 : vector<32x32xf32>
    %cst_39 = arith.constant 1.000000e+00 : f32
    %93 = vector.broadcast %cst_39 : f32 to vector<32x32xf32>
    %94 = arith.addf %93, %92 : vector<32x32xf32>
    %95 = arith.divf %93, %94 : vector<32x32xf32>
    %96 = arith.mulf %89, %95 : vector<32x32xf32>
    %97 = arith.truncf %96 : vector<32x32xf32> to vector<32x32xbf16>
    %cst_40 = arith.constant dense<0.000000e+00> : vector<32x64xf32>
    %98 = tpu.matmul %97, %67, %cst_40 {dimension_numbers = #tpu.dot_dimension_numbers<[1], [0], [0], [1], [0, 0, 1, 1], [], []>} : vector<32x32xbf16>, vector<32x64xbf16>, vector<32x64xf32> -> vector<32x64xf32>
    %99 = vector.broadcast %68 : vector<1x64xf32> to vector<32x64xf32>
    %100 = arith.addf %98, %99 : vector<32x64xf32>
    %101 = vector.extract_strided_slice %100 {offsets = [0, 0], sizes = [32, 32], strides = [1, 1]} : vector<32x64xf32> to vector<32x32xf32>
    %102 = arith.addf %62, %101 : vector<32x32xf32>
    %103 = vector.extract_strided_slice %100 {offsets = [0, 32], sizes = [32, 32], strides = [1, 1]} : vector<32x64xf32> to vector<32x32xf32>
    %104 = arith.addf %103, %64 : vector<32x32xf32>
    %c0_41 = arith.constant 0 : index
    %c0_42 = arith.constant 0 : index
    %105 = vector.load %arg12[%c0_41, %c0_42] : memref<96x64xbf16, #tpu.memory_space<vmem>>, vector<96x64xbf16>
    %c0_43 = arith.constant 0 : index
    %c0_44 = arith.constant 0 : index
    %106 = vector.load %arg13[%c0_43, %c0_44] : memref<1x64xf32, #tpu.memory_space<vmem>>, vector<1x64xf32>
    %c0_45 = arith.constant 0 : index
    %c0_46 = arith.constant 0 : index
    %107 = vector.load %arg14[%c0_45, %c0_46] : memref<32x64xbf16, #tpu.memory_space<vmem>>, vector<32x64xbf16>
    %c0_47 = arith.constant 0 : index
    %c0_48 = arith.constant 0 : index
    %108 = vector.load %arg15[%c0_47, %c0_48] : memref<1x64xf32, #tpu.memory_space<vmem>>, vector<1x64xf32>
    %c8_i32 = arith.constant 8 : i32
    %109 = tpu.dynamic_rotate %104 by %c8_i32 dim 0 : vector<32x32xf32>, i32 -> vector<32x32xf32>
    %c8_i32_49 = arith.constant 8 : i32
    %110 = vector.broadcast %c8_i32_49 : i32 to vector<32x1xi32>
    %111 = arith.cmpi sge, %16, %110 : vector<32x1xi32>
    %cst_50 = arith.constant 0.000000e+00 : f32
    %112 = vector.shape_cast %111 : vector<32x1xi1> to vector<32x1xi1>
    %113 = vector.broadcast %112 : vector<32x1xi1> to vector<32x32xi1>
    %114 = vector.broadcast %cst_50 : f32 to vector<32x32xf32>
    %115 = arith.select %113, %109, %114 : vector<32x32xi1>, vector<32x32xf32>
    %c4_i32_51 = arith.constant 4 : i32
    %116 = tpu.dynamic_rotate %104 by %c4_i32_51 dim 0 : vector<32x32xf32>, i32 -> vector<32x32xf32>
    %c4_i32_52 = arith.constant 4 : i32
    %117 = vector.broadcast %c4_i32_52 : i32 to vector<32x1xi32>
    %118 = arith.cmpi sge, %16, %117 : vector<32x1xi32>
    %cst_53 = arith.constant 0.000000e+00 : f32
    %119 = vector.shape_cast %118 : vector<32x1xi1> to vector<32x1xi1>
    %120 = vector.broadcast %119 : vector<32x1xi1> to vector<32x32xi1>
    %121 = vector.broadcast %cst_53 : f32 to vector<32x32xf32>
    %122 = arith.select %120, %116, %121 : vector<32x32xi1>, vector<32x32xf32>
    %123 = tpu.concatenate %115, %122, %104 in 1 : vector<32x32xf32>, vector<32x32xf32>, vector<32x32xf32> -> vector<32x96xf32>
    %124 = arith.truncf %123 : vector<32x96xf32> to vector<32x96xbf16>
    %cst_54 = arith.constant dense<0.000000e+00> : vector<32x64xf32>
    %125 = tpu.matmul %124, %105, %cst_54 {dimension_numbers = #tpu.dot_dimension_numbers<[1], [0], [0], [1], [0, 0, 1, 1], [], []>} : vector<32x96xbf16>, vector<96x64xbf16>, vector<32x64xf32> -> vector<32x64xf32>
    %126 = vector.broadcast %106 : vector<1x64xf32> to vector<32x64xf32>
    %127 = arith.addf %125, %126 : vector<32x64xf32>
    %128 = vector.extract_strided_slice %127 {offsets = [0, 0], sizes = [32, 32], strides = [1, 1]} : vector<32x64xf32> to vector<32x32xf32>
    %129 = math.tanh %128 : vector<32x32xf32>
    %130 = vector.extract_strided_slice %127 {offsets = [0, 32], sizes = [32, 32], strides = [1, 1]} : vector<32x64xf32> to vector<32x32xf32>
    %131 = arith.negf %130 : vector<32x32xf32>
    %132 = math.exp %131 : vector<32x32xf32>
    %cst_55 = arith.constant 1.000000e+00 : f32
    %133 = vector.broadcast %cst_55 : f32 to vector<32x32xf32>
    %134 = arith.addf %133, %132 : vector<32x32xf32>
    %135 = arith.divf %133, %134 : vector<32x32xf32>
    %136 = arith.mulf %129, %135 : vector<32x32xf32>
    %137 = arith.truncf %136 : vector<32x32xf32> to vector<32x32xbf16>
    %cst_56 = arith.constant dense<0.000000e+00> : vector<32x64xf32>
    %138 = tpu.matmul %137, %107, %cst_56 {dimension_numbers = #tpu.dot_dimension_numbers<[1], [0], [0], [1], [0, 0, 1, 1], [], []>} : vector<32x32xbf16>, vector<32x64xbf16>, vector<32x64xf32> -> vector<32x64xf32>
    %139 = vector.broadcast %108 : vector<1x64xf32> to vector<32x64xf32>
    %140 = arith.addf %138, %139 : vector<32x64xf32>
    %141 = vector.extract_strided_slice %140 {offsets = [0, 0], sizes = [32, 32], strides = [1, 1]} : vector<32x64xf32> to vector<32x32xf32>
    %142 = arith.addf %102, %141 : vector<32x32xf32>
    %143 = vector.extract_strided_slice %140 {offsets = [0, 32], sizes = [32, 32], strides = [1, 1]} : vector<32x64xf32> to vector<32x32xf32>
    %144 = arith.addf %143, %104 : vector<32x32xf32>
    %c0_57 = arith.constant 0 : index
    %c0_58 = arith.constant 0 : index
    %145 = vector.load %arg16[%c0_57, %c0_58] : memref<96x64xbf16, #tpu.memory_space<vmem>>, vector<96x64xbf16>
    %c0_59 = arith.constant 0 : index
    %c0_60 = arith.constant 0 : index
    %146 = vector.load %arg17[%c0_59, %c0_60] : memref<1x64xf32, #tpu.memory_space<vmem>>, vector<1x64xf32>
    %c0_61 = arith.constant 0 : index
    %c0_62 = arith.constant 0 : index
    %147 = vector.load %arg18[%c0_61, %c0_62] : memref<32x64xbf16, #tpu.memory_space<vmem>>, vector<32x64xbf16>
    %c0_63 = arith.constant 0 : index
    %c0_64 = arith.constant 0 : index
    %148 = vector.load %arg19[%c0_63, %c0_64] : memref<1x64xf32, #tpu.memory_space<vmem>>, vector<1x64xf32>
    %c2_i32_65 = arith.constant 2 : i32
    %149 = tpu.dynamic_rotate %144 by %c2_i32_65 dim 0 : vector<32x32xf32>, i32 -> vector<32x32xf32>
    %c2_i32_66 = arith.constant 2 : i32
    %150 = vector.broadcast %c2_i32_66 : i32 to vector<32x1xi32>
    %151 = arith.cmpi sge, %16, %150 : vector<32x1xi32>
    %cst_67 = arith.constant 0.000000e+00 : f32
    %152 = vector.shape_cast %151 : vector<32x1xi1> to vector<32x1xi1>
    %153 = vector.broadcast %152 : vector<32x1xi1> to vector<32x32xi1>
    %154 = vector.broadcast %cst_67 : f32 to vector<32x32xf32>
    %155 = arith.select %153, %149, %154 : vector<32x32xi1>, vector<32x32xf32>
    %c1_i32_68 = arith.constant 1 : i32
    %156 = tpu.dynamic_rotate %144 by %c1_i32_68 dim 0 : vector<32x32xf32>, i32 -> vector<32x32xf32>
    %c1_i32_69 = arith.constant 1 : i32
    %157 = vector.broadcast %c1_i32_69 : i32 to vector<32x1xi32>
    %158 = arith.cmpi sge, %16, %157 : vector<32x1xi32>
    %cst_70 = arith.constant 0.000000e+00 : f32
    %159 = vector.shape_cast %158 : vector<32x1xi1> to vector<32x1xi1>
    %160 = vector.broadcast %159 : vector<32x1xi1> to vector<32x32xi1>
    %161 = vector.broadcast %cst_70 : f32 to vector<32x32xf32>
    %162 = arith.select %160, %156, %161 : vector<32x32xi1>, vector<32x32xf32>
    %163 = tpu.concatenate %155, %162, %144 in 1 : vector<32x32xf32>, vector<32x32xf32>, vector<32x32xf32> -> vector<32x96xf32>
    %164 = arith.truncf %163 : vector<32x96xf32> to vector<32x96xbf16>
    %cst_71 = arith.constant dense<0.000000e+00> : vector<32x64xf32>
    %165 = tpu.matmul %164, %145, %cst_71 {dimension_numbers = #tpu.dot_dimension_numbers<[1], [0], [0], [1], [0, 0, 1, 1], [], []>} : vector<32x96xbf16>, vector<96x64xbf16>, vector<32x64xf32> -> vector<32x64xf32>
    %166 = vector.broadcast %146 : vector<1x64xf32> to vector<32x64xf32>
    %167 = arith.addf %165, %166 : vector<32x64xf32>
    %168 = vector.extract_strided_slice %167 {offsets = [0, 0], sizes = [32, 32], strides = [1, 1]} : vector<32x64xf32> to vector<32x32xf32>
    %169 = math.tanh %168 : vector<32x32xf32>
    %170 = vector.extract_strided_slice %167 {offsets = [0, 32], sizes = [32, 32], strides = [1, 1]} : vector<32x64xf32> to vector<32x32xf32>
    %171 = arith.negf %170 : vector<32x32xf32>
    %172 = math.exp %171 : vector<32x32xf32>
    %cst_72 = arith.constant 1.000000e+00 : f32
    %173 = vector.broadcast %cst_72 : f32 to vector<32x32xf32>
    %174 = arith.addf %173, %172 : vector<32x32xf32>
    %175 = arith.divf %173, %174 : vector<32x32xf32>
    %176 = arith.mulf %169, %175 : vector<32x32xf32>
    %177 = arith.truncf %176 : vector<32x32xf32> to vector<32x32xbf16>
    %cst_73 = arith.constant dense<0.000000e+00> : vector<32x64xf32>
    %178 = tpu.matmul %177, %147, %cst_73 {dimension_numbers = #tpu.dot_dimension_numbers<[1], [0], [0], [1], [0, 0, 1, 1], [], []>} : vector<32x32xbf16>, vector<32x64xbf16>, vector<32x64xf32> -> vector<32x64xf32>
    %179 = vector.broadcast %148 : vector<1x64xf32> to vector<32x64xf32>
    %180 = arith.addf %178, %179 : vector<32x64xf32>
    %181 = vector.extract_strided_slice %180 {offsets = [0, 0], sizes = [32, 32], strides = [1, 1]} : vector<32x64xf32> to vector<32x32xf32>
    %182 = arith.addf %142, %181 : vector<32x32xf32>
    %183 = vector.extract_strided_slice %180 {offsets = [0, 32], sizes = [32, 32], strides = [1, 1]} : vector<32x64xf32> to vector<32x32xf32>
    %184 = arith.addf %183, %144 : vector<32x32xf32>
    %c0_74 = arith.constant 0 : index
    %c0_75 = arith.constant 0 : index
    %185 = vector.load %arg20[%c0_74, %c0_75] : memref<96x64xbf16, #tpu.memory_space<vmem>>, vector<96x64xbf16>
    %c0_76 = arith.constant 0 : index
    %c0_77 = arith.constant 0 : index
    %186 = vector.load %arg21[%c0_76, %c0_77] : memref<1x64xf32, #tpu.memory_space<vmem>>, vector<1x64xf32>
    %c0_78 = arith.constant 0 : index
    %c0_79 = arith.constant 0 : index
    %187 = vector.load %arg22[%c0_78, %c0_79] : memref<32x64xbf16, #tpu.memory_space<vmem>>, vector<32x64xbf16>
    %c0_80 = arith.constant 0 : index
    %c0_81 = arith.constant 0 : index
    %188 = vector.load %arg23[%c0_80, %c0_81] : memref<1x64xf32, #tpu.memory_space<vmem>>, vector<1x64xf32>
    %c4_i32_82 = arith.constant 4 : i32
    %189 = tpu.dynamic_rotate %184 by %c4_i32_82 dim 0 : vector<32x32xf32>, i32 -> vector<32x32xf32>
    %c4_i32_83 = arith.constant 4 : i32
    %190 = vector.broadcast %c4_i32_83 : i32 to vector<32x1xi32>
    %191 = arith.cmpi sge, %16, %190 : vector<32x1xi32>
    %cst_84 = arith.constant 0.000000e+00 : f32
    %192 = vector.shape_cast %191 : vector<32x1xi1> to vector<32x1xi1>
    %193 = vector.broadcast %192 : vector<32x1xi1> to vector<32x32xi1>
    %194 = vector.broadcast %cst_84 : f32 to vector<32x32xf32>
    %195 = arith.select %193, %189, %194 : vector<32x32xi1>, vector<32x32xf32>
    %c2_i32_85 = arith.constant 2 : i32
    %196 = tpu.dynamic_rotate %184 by %c2_i32_85 dim 0 : vector<32x32xf32>, i32 -> vector<32x32xf32>
    %c2_i32_86 = arith.constant 2 : i32
    %197 = vector.broadcast %c2_i32_86 : i32 to vector<32x1xi32>
    %198 = arith.cmpi sge, %16, %197 : vector<32x1xi32>
    %cst_87 = arith.constant 0.000000e+00 : f32
    %199 = vector.shape_cast %198 : vector<32x1xi1> to vector<32x1xi1>
    %200 = vector.broadcast %199 : vector<32x1xi1> to vector<32x32xi1>
    %201 = vector.broadcast %cst_87 : f32 to vector<32x32xf32>
    %202 = arith.select %200, %196, %201 : vector<32x32xi1>, vector<32x32xf32>
    %203 = tpu.concatenate %195, %202, %184 in 1 : vector<32x32xf32>, vector<32x32xf32>, vector<32x32xf32> -> vector<32x96xf32>
    %204 = arith.truncf %203 : vector<32x96xf32> to vector<32x96xbf16>
    %cst_88 = arith.constant dense<0.000000e+00> : vector<32x64xf32>
    %205 = tpu.matmul %204, %185, %cst_88 {dimension_numbers = #tpu.dot_dimension_numbers<[1], [0], [0], [1], [0, 0, 1, 1], [], []>} : vector<32x96xbf16>, vector<96x64xbf16>, vector<32x64xf32> -> vector<32x64xf32>
    %206 = vector.broadcast %186 : vector<1x64xf32> to vector<32x64xf32>
    %207 = arith.addf %205, %206 : vector<32x64xf32>
    %208 = vector.extract_strided_slice %207 {offsets = [0, 0], sizes = [32, 32], strides = [1, 1]} : vector<32x64xf32> to vector<32x32xf32>
    %209 = math.tanh %208 : vector<32x32xf32>
    %210 = vector.extract_strided_slice %207 {offsets = [0, 32], sizes = [32, 32], strides = [1, 1]} : vector<32x64xf32> to vector<32x32xf32>
    %211 = arith.negf %210 : vector<32x32xf32>
    %212 = math.exp %211 : vector<32x32xf32>
    %cst_89 = arith.constant 1.000000e+00 : f32
    %213 = vector.broadcast %cst_89 : f32 to vector<32x32xf32>
    %214 = arith.addf %213, %212 : vector<32x32xf32>
    %215 = arith.divf %213, %214 : vector<32x32xf32>
    %216 = arith.mulf %209, %215 : vector<32x32xf32>
    %217 = arith.truncf %216 : vector<32x32xf32> to vector<32x32xbf16>
    %cst_90 = arith.constant dense<0.000000e+00> : vector<32x64xf32>
    %218 = tpu.matmul %217, %187, %cst_90 {dimension_numbers = #tpu.dot_dimension_numbers<[1], [0], [0], [1], [0, 0, 1, 1], [], []>} : vector<32x32xbf16>, vector<32x64xbf16>, vector<32x64xf32> -> vector<32x64xf32>
    %219 = vector.broadcast %188 : vector<1x64xf32> to vector<32x64xf32>
    %220 = arith.addf %218, %219 : vector<32x64xf32>
    %221 = vector.extract_strided_slice %220 {offsets = [0, 0], sizes = [32, 32], strides = [1, 1]} : vector<32x64xf32> to vector<32x32xf32>
    %222 = arith.addf %182, %221 : vector<32x32xf32>
    %223 = vector.extract_strided_slice %220 {offsets = [0, 32], sizes = [32, 32], strides = [1, 1]} : vector<32x64xf32> to vector<32x32xf32>
    %224 = arith.addf %223, %184 : vector<32x32xf32>
    %c0_91 = arith.constant 0 : index
    %c0_92 = arith.constant 0 : index
    %225 = vector.load %arg24[%c0_91, %c0_92] : memref<96x64xbf16, #tpu.memory_space<vmem>>, vector<96x64xbf16>
    %c0_93 = arith.constant 0 : index
    %c0_94 = arith.constant 0 : index
    %226 = vector.load %arg25[%c0_93, %c0_94] : memref<1x64xf32, #tpu.memory_space<vmem>>, vector<1x64xf32>
    %c0_95 = arith.constant 0 : index
    %c0_96 = arith.constant 0 : index
    %227 = vector.load %arg26[%c0_95, %c0_96] : memref<32x32xbf16, #tpu.memory_space<vmem>>, vector<32x32xbf16>
    %c0_97 = arith.constant 0 : index
    %c0_98 = arith.constant 0 : index
    %228 = vector.load %arg27[%c0_97, %c0_98] : memref<1x32xf32, #tpu.memory_space<vmem>>, vector<1x32xf32>
    %c8_i32_99 = arith.constant 8 : i32
    %229 = tpu.dynamic_rotate %224 by %c8_i32_99 dim 0 : vector<32x32xf32>, i32 -> vector<32x32xf32>
    %c8_i32_100 = arith.constant 8 : i32
    %230 = vector.broadcast %c8_i32_100 : i32 to vector<32x1xi32>
    %231 = arith.cmpi sge, %16, %230 : vector<32x1xi32>
    %cst_101 = arith.constant 0.000000e+00 : f32
    %232 = vector.shape_cast %231 : vector<32x1xi1> to vector<32x1xi1>
    %233 = vector.broadcast %232 : vector<32x1xi1> to vector<32x32xi1>
    %234 = vector.broadcast %cst_101 : f32 to vector<32x32xf32>
    %235 = arith.select %233, %229, %234 : vector<32x32xi1>, vector<32x32xf32>
    %c4_i32_102 = arith.constant 4 : i32
    %236 = tpu.dynamic_rotate %224 by %c4_i32_102 dim 0 : vector<32x32xf32>, i32 -> vector<32x32xf32>
    %c4_i32_103 = arith.constant 4 : i32
    %237 = vector.broadcast %c4_i32_103 : i32 to vector<32x1xi32>
    %238 = arith.cmpi sge, %16, %237 : vector<32x1xi32>
    %cst_104 = arith.constant 0.000000e+00 : f32
    %239 = vector.shape_cast %238 : vector<32x1xi1> to vector<32x1xi1>
    %240 = vector.broadcast %239 : vector<32x1xi1> to vector<32x32xi1>
    %241 = vector.broadcast %cst_104 : f32 to vector<32x32xf32>
    %242 = arith.select %240, %236, %241 : vector<32x32xi1>, vector<32x32xf32>
    %243 = tpu.concatenate %235, %242, %224 in 1 : vector<32x32xf32>, vector<32x32xf32>, vector<32x32xf32> -> vector<32x96xf32>
    %244 = arith.truncf %243 : vector<32x96xf32> to vector<32x96xbf16>
    %cst_105 = arith.constant dense<0.000000e+00> : vector<32x64xf32>
    %245 = tpu.matmul %244, %225, %cst_105 {dimension_numbers = #tpu.dot_dimension_numbers<[1], [0], [0], [1], [0, 0, 1, 1], [], []>} : vector<32x96xbf16>, vector<96x64xbf16>, vector<32x64xf32> -> vector<32x64xf32>
    %246 = vector.broadcast %226 : vector<1x64xf32> to vector<32x64xf32>
    %247 = arith.addf %245, %246 : vector<32x64xf32>
    %248 = vector.extract_strided_slice %247 {offsets = [0, 0], sizes = [32, 32], strides = [1, 1]} : vector<32x64xf32> to vector<32x32xf32>
    %249 = math.tanh %248 : vector<32x32xf32>
    %250 = vector.extract_strided_slice %247 {offsets = [0, 32], sizes = [32, 32], strides = [1, 1]} : vector<32x64xf32> to vector<32x32xf32>
    %251 = arith.negf %250 : vector<32x32xf32>
    %252 = math.exp %251 : vector<32x32xf32>
    %cst_106 = arith.constant 1.000000e+00 : f32
    %253 = vector.broadcast %cst_106 : f32 to vector<32x32xf32>
    %254 = arith.addf %253, %252 : vector<32x32xf32>
    %255 = arith.divf %253, %254 : vector<32x32xf32>
    %256 = arith.mulf %249, %255 : vector<32x32xf32>
    %257 = arith.truncf %256 : vector<32x32xf32> to vector<32x32xbf16>
    %cst_107 = arith.constant dense<0.000000e+00> : vector<32x32xf32>
    %258 = tpu.matmul %257, %227, %cst_107 {dimension_numbers = #tpu.dot_dimension_numbers<[1], [0], [0], [1], [0, 0, 1, 1], [], []>} : vector<32x32xbf16>, vector<32x32xbf16>, vector<32x32xf32> -> vector<32x32xf32>
    %259 = vector.broadcast %228 : vector<1x32xf32> to vector<32x32xf32>
    %260 = arith.addf %258, %259 : vector<32x32xf32>
    %261 = arith.addf %222, %260 : vector<32x32xf32>
    %c0_108 = arith.constant 0 : index
    %c0_109 = arith.constant 0 : index
    %262 = vector.load %arg28[%c0_108, %c0_109] : memref<32x32xbf16, #tpu.memory_space<vmem>>, vector<32x32xbf16>
    %c0_110 = arith.constant 0 : index
    %c0_111 = arith.constant 0 : index
    %263 = vector.load %arg29[%c0_110, %c0_111] : memref<1x32xf32, #tpu.memory_space<vmem>>, vector<1x32xf32>
    %cst_112 = arith.constant 0.000000e+00 : f32
    %264 = vector.broadcast %cst_112 : f32 to vector<32x32xf32>
    %265 = arith.maximumf %261, %264 : vector<32x32xf32>
    %266 = arith.truncf %265 : vector<32x32xf32> to vector<32x32xbf16>
    %cst_113 = arith.constant dense<0.000000e+00> : vector<32x32xf32>
    %267 = tpu.matmul %266, %262, %cst_113 {dimension_numbers = #tpu.dot_dimension_numbers<[1], [0], [0], [1], [0, 0, 1, 1], [], []>} : vector<32x32xbf16>, vector<32x32xbf16>, vector<32x32xf32> -> vector<32x32xf32>
    %268 = vector.broadcast %263 : vector<1x32xf32> to vector<32x32xf32>
    %269 = arith.addf %267, %268 : vector<32x32xf32>
    %c0_114 = arith.constant 0 : index
    %c0_115 = arith.constant 0 : index
    %270 = vector.load %arg30[%c0_114, %c0_115] : memref<32x128xbf16, #tpu.memory_space<vmem>>, vector<32x128xbf16>
    %c0_116 = arith.constant 0 : index
    %c0_117 = arith.constant 0 : index
    %271 = vector.load %arg31[%c0_116, %c0_117] : memref<1x128xf32, #tpu.memory_space<vmem>>, vector<1x128xf32>
    %cst_118 = arith.constant 0.000000e+00 : f32
    %272 = vector.broadcast %cst_118 : f32 to vector<32x32xf32>
    %273 = arith.maximumf %269, %272 : vector<32x32xf32>
    %274 = arith.truncf %273 : vector<32x32xf32> to vector<32x32xbf16>
    %cst_119 = arith.constant dense<0.000000e+00> : vector<32x128xf32>
    %275 = tpu.matmul %274, %270, %cst_119 {dimension_numbers = #tpu.dot_dimension_numbers<[1], [0], [0], [1], [0, 0, 1, 1], [], []>} : vector<32x32xbf16>, vector<32x128xbf16>, vector<32x128xf32> -> vector<32x128xf32>
    %276 = vector.broadcast %271 : vector<1x128xf32> to vector<32x128xf32>
    %277 = arith.addf %275, %276 : vector<32x128xf32>
    %c0_120 = arith.constant 0 : index
    %c0_121 = arith.constant 0 : index
    %278 = vector.load %arg32[%c0_120, %c0_121] : memref<32x128xf32, #tpu.memory_space<vmem>>, vector<32x128xf32>
    tpu.vector_store %arg32[%c0_120, %c0_121], %277 {strides = array<i32>} : memref<32x128xf32, #tpu.memory_space<vmem>>, vector<32x128xf32>,
    return
  }
  func.func @transform_0(%arg0: i32) -> (i32, i32) {
    %c0_i32 = arith.constant 0 : i32
    %c0_i32_0 = arith.constant 0 : i32
    %c0_i32_1 = arith.constant 0 : i32
    return %c0_i32, %c0_i32_0 : i32, i32
  }
  func.func @transform_1(%arg0: i32) -> (i32, i32) {
    %c0_i32 = arith.constant 0 : i32
    %c0_i32_0 = arith.constant 0 : i32
    %c0_i32_1 = arith.constant 0 : i32
    return %c0_i32, %c0_i32_0 : i32, i32
  }
  func.func @transform_2(%arg0: i32) -> (i32, i32) {
    %c0_i32 = arith.constant 0 : i32
    %c0_i32_0 = arith.constant 0 : i32
    %c0_i32_1 = arith.constant 0 : i32
    return %c0_i32, %c0_i32_0 : i32, i32
  }
  func.func @transform_3(%arg0: i32) -> (i32, i32) {
    %c0_i32 = arith.constant 0 : i32
    %c0_i32_0 = arith.constant 0 : i32
    %c0_i32_1 = arith.constant 0 : i32
    return %c0_i32, %c0_i32_0 : i32, i32
  }
  func.func @transform_4(%arg0: i32) -> (i32, i32) {
    %c0_i32 = arith.constant 0 : i32
    %c0_i32_0 = arith.constant 0 : i32
    %c0_i32_1 = arith.constant 0 : i32
    return %c0_i32, %c0_i32_0 : i32, i32
  }
  func.func @transform_5(%arg0: i32) -> (i32, i32) {
    %c0_i32 = arith.constant 0 : i32
    %c0_i32_0 = arith.constant 0 : i32
    %c0_i32_1 = arith.constant 0 : i32
    return %c0_i32, %c0_i32_0 : i32, i32
  }
  func.func @transform_6(%arg0: i32) -> (i32, i32) {
    %c0_i32 = arith.constant 0 : i32
    %c0_i32_0 = arith.constant 0 : i32
    %c0_i32_1 = arith.constant 0 : i32
    return %c0_i32, %c0_i32_0 : i32, i32
  }
  func.func @transform_7(%arg0: i32) -> (i32, i32) {
    %c0_i32 = arith.constant 0 : i32
    %c0_i32_0 = arith.constant 0 : i32
    %c0_i32_1 = arith.constant 0 : i32
    return %c0_i32, %c0_i32_0 : i32, i32
  }
  func.func @transform_8(%arg0: i32) -> (i32, i32) {
    %c0_i32 = arith.constant 0 : i32
    %c0_i32_0 = arith.constant 0 : i32
    %c0_i32_1 = arith.constant 0 : i32
    return %c0_i32, %c0_i32_0 : i32, i32
  }
  func.func @transform_9(%arg0: i32) -> (i32, i32) {
    %c0_i32 = arith.constant 0 : i32
    %c0_i32_0 = arith.constant 0 : i32
    %c0_i32_1 = arith.constant 0 : i32
    return %c0_i32, %c0_i32_0 : i32, i32
  }
  func.func @transform_10(%arg0: i32) -> (i32, i32) {
    %c0_i32 = arith.constant 0 : i32
    %c0_i32_0 = arith.constant 0 : i32
    %c0_i32_1 = arith.constant 0 : i32
    return %c0_i32, %c0_i32_0 : i32, i32
  }
  func.func @transform_11(%arg0: i32) -> (i32, i32) {
    %c0_i32 = arith.constant 0 : i32
    %c0_i32_0 = arith.constant 0 : i32
    %c0_i32_1 = arith.constant 0 : i32
    return %c0_i32, %c0_i32_0 : i32, i32
  }
  func.func @transform_12(%arg0: i32) -> (i32, i32) {
    %c0_i32 = arith.constant 0 : i32
    %c0_i32_0 = arith.constant 0 : i32
    %c0_i32_1 = arith.constant 0 : i32
    return %c0_i32, %c0_i32_0 : i32, i32
  }
  func.func @transform_13(%arg0: i32) -> (i32, i32) {
    %c0_i32 = arith.constant 0 : i32
    %c0_i32_0 = arith.constant 0 : i32
    %c0_i32_1 = arith.constant 0 : i32
    return %c0_i32, %c0_i32_0 : i32, i32
  }
  func.func @transform_14(%arg0: i32) -> (i32, i32) {
    %c0_i32 = arith.constant 0 : i32
    %c0_i32_0 = arith.constant 0 : i32
    %c0_i32_1 = arith.constant 0 : i32
    return %c0_i32, %c0_i32_0 : i32, i32
  }
  func.func @transform_15(%arg0: i32) -> (i32, i32) {
    %c0_i32 = arith.constant 0 : i32
    %c0_i32_0 = arith.constant 0 : i32
    %c0_i32_1 = arith.constant 0 : i32
    return %c0_i32, %c0_i32_0 : i32, i32
  }
  func.func @transform_16(%arg0: i32) -> (i32, i32) {
    %c0_i32 = arith.constant 0 : i32
    %c0_i32_0 = arith.constant 0 : i32
    %c0_i32_1 = arith.constant 0 : i32
    return %c0_i32, %c0_i32_0 : i32, i32
  }
  func.func @transform_17(%arg0: i32) -> (i32, i32) {
    %c0_i32 = arith.constant 0 : i32
    %c0_i32_0 = arith.constant 0 : i32
    %c0_i32_1 = arith.constant 0 : i32
    return %c0_i32, %c0_i32_0 : i32, i32
  }
  func.func @transform_18(%arg0: i32) -> (i32, i32) {
    %c0_i32 = arith.constant 0 : i32
    %c0_i32_0 = arith.constant 0 : i32
    %c0_i32_1 = arith.constant 0 : i32
    return %c0_i32, %c0_i32_0 : i32, i32
  }
  func.func @transform_19(%arg0: i32) -> (i32, i32) {
    %c0_i32 = arith.constant 0 : i32
    %c0_i32_0 = arith.constant 0 : i32
    %c0_i32_1 = arith.constant 0 : i32
    return %c0_i32, %c0_i32_0 : i32, i32
  }
  func.func @transform_20(%arg0: i32) -> (i32, i32) {
    %c0_i32 = arith.constant 0 : i32
    %c0_i32_0 = arith.constant 0 : i32
    %c0_i32_1 = arith.constant 0 : i32
    return %c0_i32, %c0_i32_0 : i32, i32
  }
  func.func @transform_21(%arg0: i32) -> (i32, i32) {
    %c0_i32 = arith.constant 0 : i32
    %c0_i32_0 = arith.constant 0 : i32
    %c0_i32_1 = arith.constant 0 : i32
    return %c0_i32, %c0_i32_0 : i32, i32
  }
  func.func @transform_22(%arg0: i32) -> (i32, i32) {
    %c0_i32 = arith.constant 0 : i32
    %c0_i32_0 = arith.constant 0 : i32
    %c0_i32_1 = arith.constant 0 : i32
    return %c0_i32, %c0_i32_0 : i32, i32
  }
  func.func @transform_23(%arg0: i32) -> (i32, i32) {
    %c0_i32 = arith.constant 0 : i32
    %c0_i32_0 = arith.constant 0 : i32
    %c0_i32_1 = arith.constant 0 : i32
    return %c0_i32, %c0_i32_0 : i32, i32
  }
  func.func @transform_24(%arg0: i32) -> (i32, i32) {
    %c0_i32 = arith.constant 0 : i32
    %c0_i32_0 = arith.constant 0 : i32
    %c0_i32_1 = arith.constant 0 : i32
    return %c0_i32, %c0_i32_0 : i32, i32
  }
  func.func @transform_25(%arg0: i32) -> (i32, i32) {
    %c0_i32 = arith.constant 0 : i32
    %c0_i32_0 = arith.constant 0 : i32
    %c0_i32_1 = arith.constant 0 : i32
    return %c0_i32, %c0_i32_0 : i32, i32
  }
  func.func @transform_26(%arg0: i32) -> (i32, i32) {
    %c0_i32 = arith.constant 0 : i32
    %c0_i32_0 = arith.constant 0 : i32
    %c0_i32_1 = arith.constant 0 : i32
    return %c0_i32, %c0_i32_0 : i32, i32
  }
  func.func @transform_27(%arg0: i32) -> (i32, i32) {
    %c0_i32 = arith.constant 0 : i32
    %c0_i32_0 = arith.constant 0 : i32
    %c0_i32_1 = arith.constant 0 : i32
    return %c0_i32, %c0_i32_0 : i32, i32
  }
  func.func @transform_28(%arg0: i32) -> (i32, i32) {
    %c0_i32 = arith.constant 0 : i32
    %c0_i32_0 = arith.constant 0 : i32
    %c0_i32_1 = arith.constant 0 : i32
    return %c0_i32, %c0_i32_0 : i32, i32
  }
  func.func @transform_29(%arg0: i32) -> (i32, i32) {
    %c0_i32 = arith.constant 0 : i32
    %c0_i32_0 = arith.constant 0 : i32
    %c0_i32_1 = arith.constant 0 : i32
    return %c0_i32, %c0_i32_0 : i32, i32
  }
  func.func @transform_30(%arg0: i32) -> (i32, i32) {
    %c0_i32 = arith.constant 0 : i32
    %c0_i32_0 = arith.constant 0 : i32
    %c0_i32_1 = arith.constant 0 : i32
    return %c0_i32, %c0_i32_0 : i32, i32
  }
  func.func @transform_31(%arg0: i32) -> (i32, i32) {
    %c0_i32 = arith.constant 0 : i32
    %c0_i32_0 = arith.constant 0 : i32
    %c0_i32_1 = arith.constant 0 : i32
    return %c0_i32, %c0_i32_0 : i32, i32
  }
}

</mosaic_0001>

<llo_original>
// kernel: tpu_custom_call.1
$region0: #{tpu_custom_call.1}
  #allocation0 [shape = 'u32[]', space=smem, size = 0x4, offset = 0x4, fixed_abs, tag = 'smem constant byte address 0x4 - core index']
  #allocation1 [shape = 'u32[144,128]{1,0:T(1,128)}', space=vmem, size = 0x12000, scoped, tag = 'internal scratch']
  %s0 = inlined_call_operand.smem [shape: u32[32], index: -1, kind: input, shape index: {}]
  %s1 = sld [smem:[%s0]]
  %s2 = scalar_lea.smem %s0, 1
  %s3 = sld [smem:[%s2]]
  %s4 = scalar_lea.smem %s0, 2
  %s5 = sld [smem:[%s4]]
  %s6 = scalar_lea.smem %s0, 3
  %s7 = sld [smem:[%s6]]
  %s8 = scalar_lea.smem %s0, 4
  %s9 = sld [smem:[%s8]]
  %s10 = scalar_lea.smem %s0, 5
  %s11 = sld [smem:[%s10]]
  %s12 = scalar_lea.smem %s0, 6
  %s13 = sld [smem:[%s12]]
  %s14 = scalar_lea.smem %s0, 7
  %s15 = sld [smem:[%s14]]
  %s16 = scalar_lea.smem %s0, 8
  %s17 = sld [smem:[%s16]]
  %s18 = scalar_lea.smem %s0, 9
  %s19 = sld [smem:[%s18]]
  %s20 = scalar_lea.smem %s0, 10
  %s21 = sld [smem:[%s20]]
  %s22 = scalar_lea.smem %s0, 11
  %s23 = sld [smem:[%s22]]
  %s24 = scalar_lea.smem %s0, 12
  %s25 = sld [smem:[%s24]]
  %s26 = scalar_lea.smem %s0, 13
  %s27 = sld [smem:[%s26]]
  %s28 = scalar_lea.smem %s0, 14
  %s29 = sld [smem:[%s28]]
  %s30 = scalar_lea.smem %s0, 15
  %s31 = sld [smem:[%s30]]
  %s32 = scalar_lea.smem %s0, 16
  %s33 = sld [smem:[%s32]]
  %s34 = scalar_lea.smem %s0, 17
  %s35 = sld [smem:[%s34]]
  %s36 = scalar_lea.smem %s0, 18
  %s37 = sld [smem:[%s36]]
  %s38 = scalar_lea.smem %s0, 19
  %s39 = sld [smem:[%s38]]
  %s40 = scalar_lea.smem %s0, 20
  %s41 = sld [smem:[%s40]]
  %s42 = scalar_lea.smem %s0, 21
  %s43 = sld [smem:[%s42]]
  %s44 = scalar_lea.smem %s0, 22
  %s45 = sld [smem:[%s44]]
  %s46 = scalar_lea.smem %s0, 23
  %s47 = sld [smem:[%s46]]
  %s48 = scalar_lea.smem %s0, 24
  %s49 = sld [smem:[%s48]]
  %s50 = scalar_lea.smem %s0, 25
  %s51 = sld [smem:[%s50]]
  %s52 = scalar_lea.smem %s0, 26
  %s53 = sld [smem:[%s52]]
  %s54 = scalar_lea.smem %s0, 27
  %s55 = sld [smem:[%s54]]
  %s56 = scalar_lea.smem %s0, 28
  %s57 = sld [smem:[%s56]]
  %s58 = scalar_lea.smem %s0, 29
  %s59 = sld [smem:[%s58]]
  %s60 = scalar_lea.smem %s0, 30
  %s61 = sld [smem:[%s60]]
  %s62 = scalar_lea.smem %s0, 31
  %s63 = sld [smem:[%s62]]
  %s64 = sld [smem:[#allocation0]]
  $region134: #{tpu_custom_call.1} parent=0
    _
  %s66 = ssub.s32 1, %s64
  %s67 = scalar_select 0, %s66, %s64
  $region1: #{tpu_custom_call.1} parent=0
    #allocation2 [shape = 'u8[16384]{0}', space=vmem, size = 0x4000, scoped, tag = 'output window, operand 0, single buffered']
    #allocation3 [shape = 's32[1]{0}', space=sflag, size = 0x4, scoped, tag = 'scoped memory for tpu_custom_call.1']
    %68 = vsyncpa [#allocation3], 0
    // Predicated region
    $region2: #{tpu_custom_call.1} parent=1 // pred_check
      _
    $region3: #{tpu_custom_call.1} parent=1 // pred_check_branch
      %70 = sbr.rel (0) target = $region5
    $region4: #{tpu_custom_call.1} parent=1 // pred_region
      _
    $region5: #{tpu_custom_call.1} parent=1 // pred_fallthru
      _
    // Predicated region
    $region6: #{tpu_custom_call.1} parent=1 // pred_check
      _
    $region7: #{tpu_custom_call.1} parent=1 // pred_check_branch
      %72 = sbr.rel (0) target = $region9
    $region8: #{tpu_custom_call.1} parent=1 // pred_region
      _
    $region9: #{tpu_custom_call.1} parent=1 // pred_fallthru
      _
    // Predicated region
    $region10: #{tpu_custom_call.1} parent=1 // pred_check
      _
    $region11: #{tpu_custom_call.1} parent=1 // pred_check_branch
      %74 = sbr.rel (0) target = $region13
    $region12: #{tpu_custom_call.1} parent=1 // pred_region
      _
    $region13: #{tpu_custom_call.1} parent=1 // pred_fallthru
      _
    // Predicated region
    $region14: #{tpu_custom_call.1} parent=1 // pred_check
      _
    $region15: #{tpu_custom_call.1} parent=1 // pred_check_branch
      %76 = sbr.rel (0) target = $region17
    $region16: #{tpu_custom_call.1} parent=1 // pred_region
      _
    $region17: #{tpu_custom_call.1} parent=1 // pred_fallthru
      _
    // Predicated region
    $region18: #{tpu_custom_call.1} parent=1 // pred_check
      _
    $region19: #{tpu_custom_call.1} parent=1 // pred_check_branch
      %78 = sbr.rel (0) target = $region21
    $region20: #{tpu_custom_call.1} parent=1 // pred_region
      _
    $region21: #{tpu_custom_call.1} parent=1 // pred_fallthru
      _
    // Predicated region
    $region22: #{tpu_custom_call.1} parent=1 // pred_check
      _
    $region23: #{tpu_custom_call.1} parent=1 // pred_check_branch
      %80 = sbr.rel (0) target = $region25
    $region24: #{tpu_custom_call.1} parent=1 // pred_region
      _
    $region25: #{tpu_custom_call.1} parent=1 // pred_fallthru
      _
    // Predicated region
    $region26: #{tpu_custom_call.1} parent=1 // pred_check
      _
    $region27: #{tpu_custom_call.1} parent=1 // pred_check_branch
      %82 = sbr.rel (0) target = $region29
    $region28: #{tpu_custom_call.1} parent=1 // pred_region
      _
    $region29: #{tpu_custom_call.1} parent=1 // pred_fallthru
      _
    // Predicated region
    $region30: #{tpu_custom_call.1} parent=1 // pred_check
      _
    $region31: #{tpu_custom_call.1} parent=1 // pred_check_branch
      %84 = sbr.rel (0) target = $region33
    $region32: #{tpu_custom_call.1} parent=1 // pred_region
      _
    $region33: #{tpu_custom_call.1} parent=1 // pred_fallthru
      _
    // Predicated region
    $region34: #{tpu_custom_call.1} parent=1 // pred_check
      _
    $region35: #{tpu_custom_call.1} parent=1 // pred_check_branch
      %86 = sbr.rel (0) target = $region37
    $region36: #{tpu_custom_call.1} parent=1 // pred_region
      _
    $region37: #{tpu_custom_call.1} parent=1 // pred_fallthru
      _
    // Predicated region
    $region38: #{tpu_custom_call.1} parent=1 // pred_check
      _
    $region39: #{tpu_custom_call.1} parent=1 // pred_check_branch
      %88 = sbr.rel (0) target = $region41
    $region40: #{tpu_custom_call.1} parent=1 // pred_region
      _
    $region41: #{tpu_custom_call.1} parent=1 // pred_fallthru
      _
    // Predicated region
    $region42: #{tpu_custom_call.1} parent=1 // pred_check
      _
    $region43: #{tpu_custom_call.1} parent=1 // pred_check_branch
      %90 = sbr.rel (0) target = $region45
    $region44: #{tpu_custom_call.1} parent=1 // pred_region
      _
    $region45: #{tpu_custom_call.1} parent=1 // pred_fallthru
      _
    // Predicated region
    $region46: #{tpu_custom_call.1} parent=1 // pred_check
      _
    $region47: #{tpu_custom_call.1} parent=1 // pred_check_branch
      %92 = sbr.rel (0) target = $region49
    $region48: #{tpu_custom_call.1} parent=1 // pred_region
      _
    $region49: #{tpu_custom_call.1} parent=1 // pred_fallthru
      _
    // Predicated region
    $region50: #{tpu_custom_call.1} parent=1 // pred_check
      _
    $region51: #{tpu_custom_call.1} parent=1 // pred_check_branch
      %94 = sbr.rel (0) target = $region53
    $region52: #{tpu_custom_call.1} parent=1 // pred_region
      _
    $region53: #{tpu_custom_call.1} parent=1 // pred_fallthru
      _
    // Predicated region
    $region54: #{tpu_custom_call.1} parent=1 // pred_check
      _
    $region55: #{tpu_custom_call.1} parent=1 // pred_check_branch
      %96 = sbr.rel (0) target = $region57
    $region56: #{tpu_custom_call.1} parent=1 // pred_region
      _
    $region57: #{tpu_custom_call.1} parent=1 // pred_fallthru
      _
    // Predicated region
    $region58: #{tpu_custom_call.1} parent=1 // pred_check
      _
    $region59: #{tpu_custom_call.1} parent=1 // pred_check_branch
      %98 = sbr.rel (0) target = $region61
    $region60: #{tpu_custom_call.1} parent=1 // pred_region
      _
    $region61: #{tpu_custom_call.1} parent=1 // pred_fallthru
      _
    // Predicated region
    $region62: #{tpu_custom_call.1} parent=1 // pred_check
      _
    $region63: #{tpu_custom_call.1} parent=1 // pred_check_branch
      %100 = sbr.rel (0) target = $region65
    $region64: #{tpu_custom_call.1} parent=1 // pred_region
      _
    $region65: #{tpu_custom_call.1} parent=1 // pred_fallthru
      _
    // Predicated region
    $region66: #{tpu_custom_call.1} parent=1 // pred_check
      _
    $region67: #{tpu_custom_call.1} parent=1 // pred_check_branch
      %102 = sbr.rel (0) target = $region69
    $region68: #{tpu_custom_call.1} parent=1 // pred_region
      _
    $region69: #{tpu_custom_call.1} parent=1 // pred_fallthru
      _
    // Predicated region
    $region70: #{tpu_custom_call.1} parent=1 // pred_check
      _
    $region71: #{tpu_custom_call.1} parent=1 // pred_check_branch
      %104 = sbr.rel (0) target = $region73
    $region72: #{tpu_custom_call.1} parent=1 // pred_region
      _
    $region73: #{tpu_custom_call.1} parent=1 // pred_fallthru
      _
    // Predicated region
    $region74: #{tpu_custom_call.1} parent=1 // pred_check
      _
    $region75: #{tpu_custom_call.1} parent=1 // pred_check_branch
      %106 = sbr.rel (0) target = $region77
    $region76: #{tpu_custom_call.1} parent=1 // pred_region
      _
    $region77: #{tpu_custom_call.1} parent=1 // pred_fallthru
      _
    // Predicated region
    $region78: #{tpu_custom_call.1} parent=1 // pred_check
      _
    $region79: #{tpu_custom_call.1} parent=1 // pred_check_branch
      %108 = sbr.rel (0) target = $region81
    $region80: #{tpu_custom_call.1} parent=1 // pred_region
      _
    $region81: #{tpu_custom_call.1} parent=1 // pred_fallthru
      _
    // Predicated region
    $region82: #{tpu_custom_call.1} parent=1 // pred_check
      _
    $region83: #{tpu_custom_call.1} parent=1 // pred_check_branch
      %110 = sbr.rel (0) target = $region85
    $region84: #{tpu_custom_call.1} parent=1 // pred_region
      _
    $region85: #{tpu_custom_call.1} parent=1 // pred_fallthru
      _
    // Predicated region
    $region86: #{tpu_custom_call.1} parent=1 // pred_check
      _
    $region87: #{tpu_custom_call.1} parent=1 // pred_check_branch
      %112 = sbr.rel (0) target = $region89
    $region88: #{tpu_custom_call.1} parent=1 // pred_region
      _
    $region89: #{tpu_custom_call.1} parent=1 // pred_fallthru
      _
    // Predicated region
    $region90: #{tpu_custom_call.1} parent=1 // pred_check
      _
    $region91: #{tpu_custom_call.1} parent=1 // pred_check_branch
      %114 = sbr.rel (0) target = $region93
    $region92: #{tpu_custom_call.1} parent=1 // pred_region
      _
    $region93: #{tpu_custom_call.1} parent=1 // pred_fallthru
      _
    // Predicated region
    $region94: #{tpu_custom_call.1} parent=1 // pred_check
      _
    $region95: #{tpu_custom_call.1} parent=1 // pred_check_branch
      %116 = sbr.rel (0) target = $region97
    $region96: #{tpu_custom_call.1} parent=1 // pred_region
      _
    $region97: #{tpu_custom_call.1} parent=1 // pred_fallthru
      _
    // Predicated region
    $region98: #{tpu_custom_call.1} parent=1 // pred_check
      _
    $region99: #{tpu_custom_call.1} parent=1 // pred_check_branch
      %118 = sbr.rel (0) target = $region101
    $region100: #{tpu_custom_call.1} parent=1 // pred_region
      _
    $region101: #{tpu_custom_call.1} parent=1 // pred_fallthru
      _
    // Predicated region
    $region102: #{tpu_custom_call.1} parent=1 // pred_check
      _
    $region103: #{tpu_custom_call.1} parent=1 // pred_check_branch
      %120 = sbr.rel (0) target = $region105
    $region104: #{tpu_custom_call.1} parent=1 // pred_region
      _
    $region105: #{tpu_custom_call.1} parent=1 // pred_fallthru
      _
    // Predicated region
    $region106: #{tpu_custom_call.1} parent=1 // pred_check
      _
    $region107: #{tpu_custom_call.1} parent=1 // pred_check_branch
      %122 = sbr.rel (0) target = $region109
    $region108: #{tpu_custom_call.1} parent=1 // pred_region
      _
    $region109: #{tpu_custom_call.1} parent=1 // pred_fallthru
      _
    // Predicated region
    $region110: #{tpu_custom_call.1} parent=1 // pred_check
      _
    $region111: #{tpu_custom_call.1} parent=1 // pred_check_branch
      %124 = sbr.rel (0) target = $region113
    $region112: #{tpu_custom_call.1} parent=1 // pred_region
      _
    $region113: #{tpu_custom_call.1} parent=1 // pred_fallthru
      _
    // Predicated region
    $region114: #{tpu_custom_call.1} parent=1 // pred_check
      _
    $region115: #{tpu_custom_call.1} parent=1 // pred_check_branch
      %126 = sbr.rel (0) target = $region117
    $region116: #{tpu_custom_call.1} parent=1 // pred_region
      _
    $region117: #{tpu_custom_call.1} parent=1 // pred_fallthru
      _
    // Predicated region
    $region118: #{tpu_custom_call.1} parent=1 // pred_check
      _
    $region119: #{tpu_custom_call.1} parent=1 // pred_check_branch
      %128 = sbr.rel (0) target = $region121
    $region120: #{tpu_custom_call.1} parent=1 // pred_region
      _
    $region121: #{tpu_custom_call.1} parent=1 // pred_fallthru
      _
    // Predicated region
    $region122: #{tpu_custom_call.1} parent=1 // pred_check
      _
    $region123: #{tpu_custom_call.1} parent=1 // pred_check_branch
      %130 = sbr.rel (0) target = $region125
    $region124: #{tpu_custom_call.1} parent=1 // pred_region
      _
    $region125: #{tpu_custom_call.1} parent=1 // pred_fallthru
      _
    %v132 = vlaneseq
    %v133 = vshrl.u32 %v132, 7
    %v134 = vadd.s32 %v133, 8
    %v135 = vadd.s32 %v133, 16
    %v136 = vadd.s32 %v133, 24
    %vm137 = vcmp.lt.s32.totalorder %v133, 0
    %v138 = vsub.s32 0, %v133
    %v139 = vsel %vm137, %v138, %v133
    %v140 = vshrl.u32 %v139, 4
    %v141 = vand.u32 %v139, 15
    %v142 = vsub.s32 0, %v141
    %v143 = vsel %vm137, %v142, %v141
    %vm144 = vcmp.lt.s32.totalorder %v134, 0
    %v145 = vsub.s32 0, %v134
    %v146 = vsel %vm144, %v145, %v134
    %v147 = vshrl.u32 %v146, 4
    %v148 = vand.u32 %v146, 15
    %v149 = vsub.s32 0, %v148
    %v150 = vsel %vm144, %v149, %v148
    %vm151 = vcmp.lt.s32.totalorder %v135, 0
    %v152 = vsub.s32 0, %v135
    %v153 = vsel %vm151, %v152, %v135
    %v154 = vshrl.u32 %v153, 4
    %v155 = vand.u32 %v153, 15
    %v156 = vsub.s32 0, %v155
    %v157 = vsel %vm151, %v156, %v155
    %vm158 = vcmp.lt.s32.totalorder %v136, 0
    %v159 = vsub.s32 0, %v136
    %v160 = vsel %vm158, %v159, %v136
    %v161 = vshrl.u32 %v160, 4
    %v162 = vand.u32 %v160, 15
    %v163 = vsub.s32 0, %v162
    %v164 = vsel %vm158, %v163, %v162
    %vm165 = vcmp.ne.s32.totalorder %v143, 0
    %vm166 = vcmp.ne.s32.totalorder %v150, 0
    %vm167 = vcmp.ne.s32.totalorder %v157, 0
    %vm168 = vcmp.ne.s32.totalorder %v164, 0
    %vm169 = vcmp.lt.s32.totalorder %v143, 0
    %vm170 = vcmp.lt.s32.totalorder %v150, 0
    %vm171 = vcmp.lt.s32.totalorder %v157, 0
    %vm172 = vcmp.lt.s32.totalorder %v164, 0
    %vm173 = vmand %vm169, %vm165
    %vm174 = vmand %vm170, %vm166
    %vm175 = vmand %vm171, %vm167
    %vm176 = vmand %vm172, %vm168
    %v177 = vadd.s32 %v143, 16
    %v178 = vadd.s32 %v150, 16
    %v179 = vadd.s32 %v157, 16
    %v180 = vadd.s32 %v164, 16
    %v181 = vsel %vm173, %v177, %v143
    %v182 = vsel %vm174, %v178, %v150
    %v183 = vsel %vm175, %v179, %v157
    %v184 = vsel %vm176, %v180, %v164
    %v185 = vld [vmem:[%s1] sm:$0xff]
    %v186 = vld [vmem:[%s1 + $0x8] sm:$0xff]
    %v187 = vld [vmem:[%s1 + $0x10] sm:$0xff]
    %v188 = vld [vmem:[%s1 + $0x18] sm:$0xff]
    %v189 = vld [vmem:[%s3] sm:$0xf]
    %v190 = vld [vmem:[%s5] sm:$0x1]
    %v191 = vpack.c.bf16 %v186, %v185
    %v192 = vpack.c.bf16 %v188, %v187
    %v194 = vlaneseq
    %v195 = vshrl.u32 %v194, 7
    %v196 = vsub.s32 0, %v195
    %v197 = vrot.slane %v190, %v196
    %vm199 = vcmask 64512
    %v201 = vsel %vm199, %v191, 0
    %v204 = vsel %vm199, %v192, 0
    %vm206 = vcmask 1043456
    %v208 = vsel %vm206, %v189, 0
    %210 = vmatprep.subr.bf16.mxu0 0
    %211 = vmatpush1.bf16.msra.mxu0 0
    %212 = vmatprep.subr.bf16.mxu0 0
    %213 = vmatpush1.bf16.msra.mxu0 0
    %214 = vmatprep.subr.bf16.mxu0 0
    %215 = vmatpush1.bf16.msra.mxu0 0
    %216 = vmatprep.subr.bf16.mxu0 0
    %217 = vmatpush1.bf16.msra.mxu0 0
    %218 = vmatprep.subr.bf16.mxu0 0
    %219 = vmatpush1.bf16.msra.mxu0 0
    %220 = vmatprep.subr.bf16.mxu0 0
    %221 = vmatpush1.bf16.msra.mxu0 0
    %222 = vmatprep.subr.bf16.mxu0 0
    %223 = vmatpush1.bf16.msra.mxu0 0
    %224 = vmatprep.subr.bf16.mxu0 0
    %225 = vmatpush1.bf16.msra.mxu0 %v208
    %226 = vmatprep.subr.bf16.mxu0 0
    %227 = vmatpush2.bf16.msra.mxu0 0
    %228 = vmatprep.subr.bf16.mxu0 0
    %229 = vmatpush2.bf16.msra.mxu0 0
    %230 = vmatprep.subr.bf16.mxu0 0
    %231 = vmatpush2.bf16.msra.mxu0 0
    %232 = vmatprep.subr.bf16.mxu0 0
    %233 = vmatpush2.bf16.msra.mxu0 0
    %234 = vmatprep.subr.bf16.mxu0 0
    %235 = vmatpush2.bf16.msra.mxu0 0
    %236 = vmatprep.subr.bf16.mxu0 0
    %237 = vmatpush2.bf16.msra.mxu0 0
    %238 = vmatprep.subr.bf16.mxu0 0
    %239 = vmatpush2.bf16.msra.mxu0 0
    %240 = vmatprep.subr.bf16.mxu0 0
    %241 = vmatpush2.bf16.msra.mxu0 0
    %242 = vmatprep.mubr.bf16.mxu0 0
    %243 = vmatmul.mubr.bf16.gmra.mxu0 %v201
    %v244 = vpop.f32.mrf.mxu0
    %v245 = vadd.f32 %v197, %v244
    %v246 = vpop.f32.mrf.mxu0
    %v247 = vpop.f32.mrf.mxu0
    %v248 = vadd.f32 %v197, %v247
    %v249 = vpop.f32.mrf.mxu0
    %250 = vmatprep.mubr.bf16.mxu0 0
    %251 = vmatmul.mubr.bf16.gmra.mxu0 %v204
    %v252 = vpop.f32.mrf.mxu0
    %v253 = vadd.f32 %v197, %v252
    %v254 = vpop.f32.mrf.mxu0
    %v255 = vpop.f32.mrf.mxu0
    %v256 = vadd.f32 %v197, %v255
    %v257 = vpop.f32.mrf.mxu0
    %258 = vdwg.mxu0
    %v259 = vld [vmem:[%s7] sm:$0xf]
    %v260 = vld [vmem:[%s7 + $0x4] sm:$0xf]
    %v261 = vld [vmem:[%s7 + $0x8] sm:$0xf]
    %v262 = vld [vmem:[%s7 + $0xc] sm:$0xf]
    %v263 = vld [vmem:[%s7 + $0x10] sm:$0xf]
    %v264 = vld [vmem:[%s7 + $0x14] sm:$0xf]
    %v265 = vld [vmem:[%s7 + $0x18] sm:$0xf]
    %v266 = vld [vmem:[%s7 + $0x1c] sm:$0xf]
    %v267 = vld [vmem:[%s7 + $0x20] sm:$0xf]
    %v268 = vld [vmem:[%s7 + $0x24] sm:$0xf]
    %v269 = vld [vmem:[%s7 + $0x28] sm:$0xf]
    %v270 = vld [vmem:[%s7 + $0x2c] sm:$0xf]
    %v271 = vld [vmem:[%s9] sm:$0x1]
    %v272 = vld [vmem:[%s11] sm:$0xf]
    %v273 = vld [vmem:[%s11 + $0x4] sm:$0xf]
    %v274 = vld [vmem:[%s11 + $0x8] sm:$0xf]
    %v275 = vld [vmem:[%s11 + $0xc] sm:$0xf]
    %v276 = vld [vmem:[%s13] sm:$0x1]
    %v277 = vrot.slane %v245, 6
    %v278 = vrot.slane %v248, 6
    %v279 = vrot.slane %v253, 6
    %v280 = vrot.slane %v256, 6
    %vm281 = vcmp.lt.s32.totalorder %v133, 2
    %v282 = vsel %vm281, %v279, %v280
    %v283 = vsel %vm281, %v278, %v279
    %v284 = vsel %vm281, %v277, %v278
    %v285 = vsel %vm281, %v280, %v277
    %vm286 = vcmp.ge.s32.totalorder %v181, 2
    %vm287 = vcmp.ge.s32.totalorder %v182, 2
    %vm288 = vcmp.ge.s32.totalorder %v183, 2
    %vm289 = vcmp.ge.s32.totalorder %v184, 2
    %v290 = vsel %vm286, 1, 0
    %v291 = vsel %vm287, 1, 0
    %v292 = vsel %vm288, 1, 0
    %v293 = vsel %vm289, 1, 0
    %vm294 = vcmp.eq.s32.totalorder %v290, 1
    %vm295 = vcmp.eq.s32.totalorder %v291, 1
    %vm296 = vcmp.eq.s32.totalorder %v292, 1
    %vm297 = vcmp.eq.s32.totalorder %v293, 1
    %v298 = vsel %vm294, %v285, 0.0
    %v299 = vsel %vm295, %v284, 0.0
    %v300 = vsel %vm296, %v283, 0.0
    %v301 = vsel %vm297, %v282, 0.0
    %v302 = vrot.slane %v245, 7
    %v303 = vrot.slane %v248, 7
    %v304 = vrot.slane %v253, 7
    %v305 = vrot.slane %v256, 7
    %vm306 = vcmp.lt.s32.totalorder %v133, 1
    %v307 = vsel %vm306, %v304, %v305
    %v308 = vsel %vm306, %v303, %v304
    %v309 = vsel %vm306, %v302, %v303
    %v310 = vsel %vm306, %v305, %v302
    %vm311 = vcmp.ge.s32.totalorder %v181, 1
    %vm312 = vcmp.ge.s32.totalorder %v182, 1
    %vm313 = vcmp.ge.s32.totalorder %v183, 1
    %vm314 = vcmp.ge.s32.totalorder %v184, 1
    %v315 = vsel %vm311, 1, 0
    %v316 = vsel %vm312, 1, 0
    %v317 = vsel %vm313, 1, 0
    %v318 = vsel %vm314, 1, 0
    %vm319 = vcmp.eq.s32.totalorder %v315, 1
    %vm320 = vcmp.eq.s32.totalorder %v316, 1
    %vm321 = vcmp.eq.s32.totalorder %v317, 1
    %vm322 = vcmp.eq.s32.totalorder %v318, 1
    %v323 = vsel %vm319, %v310, 0.0
    %v324 = vsel %vm320, %v309, 0.0
    %v325 = vsel %vm321, %v308, 0.0
    %v326 = vsel %vm322, %v307, 0.0
    %331 = vrot.lane.b32.xlu0 %v323, 32
    %v332 = vpop.permute.xlu0 %331
    %333 = vrot.lane.b32.xlu0 %v324, 32
    %v334 = vpop.permute.xlu0 %333
    %335 = vrot.lane.b32.xlu0 %v325, 32
    %v336 = vpop.permute.xlu0 %335
    %337 = vrot.lane.b32.xlu0 %v326, 32
    %v338 = vpop.permute.xlu0 %337
    %347 = vrot.lane.b32.xlu0 %v245, 64
    %v348 = vpop.permute.xlu0 %347
    %349 = vrot.lane.b32.xlu0 %v248, 64
    %v350 = vpop.permute.xlu0 %349
    %351 = vrot.lane.b32.xlu0 %v253, 64
    %v352 = vpop.permute.xlu0 %351
    %353 = vrot.lane.b32.xlu0 %v256, 64
    %v354 = vpop.permute.xlu0 %353
    %vm359 = vcmask 261120
    %v360 = vsel %vm359, %v298, %v332
    %v361 = vsel %vm359, %v299, %v334
    %v362 = vsel %vm359, %v300, %v336
    %v363 = vsel %vm359, %v301, %v338
    %vm364 = vcmask 523264
    %v365 = vsel %vm364, %v360, %v348
    %v366 = vsel %vm364, %v361, %v350
    %v367 = vsel %vm364, %v362, %v352
    %v368 = vsel %vm364, %v363, %v354
    %v369 = vpack.c.bf16 %v366, %v365
    %v370 = vpack.c.bf16 %v368, %v367
    %v372 = vlaneseq
    %v373 = vshrl.u32 %v372, 7
    %v374 = vsub.s32 0, %v373
    %v375 = vrot.slane %v271, %v374
    %v389 = vunpack.c.l.b16 %v259
    %v390 = vunpack.c.l.b16 %v260
    %v391 = vunpack.c.l.b16 %v261
    %v392 = vunpack.c.l.b16 %v262
    %v393 = vunpack.c.l.b16 %v263
    %v394 = vunpack.c.l.b16 %v264
    %v395 = vunpack.c.l.b16 %v265
    %v396 = vunpack.c.l.b16 %v266
    %v397 = vunpack.c.l.b16 %v267
    %v398 = vunpack.c.l.b16 %v268
    %v399 = vunpack.c.l.b16 %v269
    %v400 = vunpack.c.l.b16 %v270
    %v401 = vpack.c.b16 %v390, %v389
    %v402 = vpack.c.b16 %v392, %v391
    %v403 = vpack.c.b16 %v394, %v393
    %v404 = vpack.c.b16 %v396, %v395
    %v405 = vpack.c.b16 %v398, %v397
    %v406 = vpack.c.b16 %v400, %v399
    %vm413 = vcmask 785408
    %v415 = vsel %vm413, %v369, 0
    %v418 = vsel %vm413, %v370, 0
    %420 = vmatprep.subr.bf16.mxu0 0
    %421 = vmatpush1.bf16.msra.mxu0 0
    %422 = vmatprep.subr.bf16.mxu0 0
    %423 = vmatpush1.bf16.msra.mxu0 0
    %424 = vmatprep.subr.bf16.mxu0 0
    %425 = vmatpush1.bf16.msra.mxu0 %v406
    %426 = vmatprep.subr.bf16.mxu0 0
    %427 = vmatpush1.bf16.msra.mxu0 %v405
    %428 = vmatprep.subr.bf16.mxu0 0
    %429 = vmatpush1.bf16.msra.mxu0 %v404
    %430 = vmatprep.subr.bf16.mxu0 0
    %431 = vmatpush1.bf16.msra.mxu0 %v403
    %432 = vmatprep.subr.bf16.mxu0 0
    %433 = vmatpush1.bf16.msra.mxu0 %v402
    %434 = vmatprep.subr.bf16.mxu0 0
    %435 = vmatpush1.bf16.msra.mxu0 %v401
    %436 = vmatprep.subr.bf16.mxu0 0
    %437 = vmatpush2.bf16.msra.mxu0 0
    %438 = vmatprep.subr.bf16.mxu0 0
    %439 = vmatpush2.bf16.msra.mxu0 0
    %440 = vmatprep.subr.bf16.mxu0 0
    %441 = vmatpush2.bf16.msra.mxu0 0
    %442 = vmatprep.subr.bf16.mxu0 0
    %443 = vmatpush2.bf16.msra.mxu0 0
    %444 = vmatprep.subr.bf16.mxu0 0
    %445 = vmatpush2.bf16.msra.mxu0 0
    %446 = vmatprep.subr.bf16.mxu0 0
    %447 = vmatpush2.bf16.msra.mxu0 0
    %448 = vmatprep.subr.bf16.mxu0 0
    %449 = vmatpush2.bf16.msra.mxu0 0
    %450 = vmatprep.subr.bf16.mxu0 0
    %451 = vmatpush2.bf16.msra.mxu0 0
    %452 = vmatprep.mubr.bf16.mxu0 0
    %453 = vmatmul.mubr.bf16.gmra.mxu0 %v415
    %v454 = vpop.f32.mrf.mxu0
    %v455 = vadd.f32 %v375, %v454
    %v456 = vpop.f32.mrf.mxu0
    %v457 = vpop.f32.mrf.mxu0
    %v458 = vadd.f32 %v375, %v457
    %v459 = vpop.f32.mrf.mxu0
    %460 = vmatprep.mubr.bf16.mxu0 0
    %461 = vmatmul.mubr.bf16.gmra.mxu0 %v418
    %v462 = vpop.f32.mrf.mxu0
    %v463 = vadd.f32 %v375, %v462
    %v464 = vpop.f32.mrf.mxu0
    %v465 = vpop.f32.mrf.mxu0
    %v466 = vadd.f32 %v375, %v465
    %v467 = vpop.f32.mrf.mxu0
    %468 = vdwg.mxu0
    %v469 = vtanh.pop %v455
    %v470 = vtanh.pop %v458
    %v471 = vtanh.pop %v463
    %v472 = vtanh.pop %v466
    %v473 = vxor.u32 %v455, 2147483648
    %v474 = vxor.u32 %v458, 2147483648
    %v475 = vxor.u32 %v463, 2147483648
    %v476 = vxor.u32 %v466, 2147483648
    %v477 = vmul.f32 %v473, 1.442695
    %v478 = vpow.pop %v477
    %v479 = vmul.f32 %v474, 1.442695
    %v480 = vpow.pop %v479
    %v481 = vmul.f32 %v475, 1.442695
    %v482 = vpow.pop %v481
    %v483 = vmul.f32 %v476, 1.442695
    %v484 = vpow.pop %v483
    %v485 = vadd.f32 %v478, 1.0
    %v486 = vadd.f32 %v480, 1.0
    %v487 = vadd.f32 %v482, 1.0
    %v488 = vadd.f32 %v484, 1.0
    %v489 = vrcp.pop %v485
    %v490 = vmul.f32 1.0, %v489
    %v491 = vrcp.pop %v486
    %v492 = vmul.f32 1.0, %v491
    %v493 = vrcp.pop %v487
    %v494 = vmul.f32 1.0, %v493
    %v495 = vrcp.pop %v488
    %v496 = vmul.f32 1.0, %v495
    %501 = vrot.lane.b32.xlu0 %v490, 96
    %v502 = vpop.permute.xlu0 %501
    %503 = vrot.lane.b32.xlu0 %v492, 96
    %v504 = vpop.permute.xlu0 %503
    %505 = vrot.lane.b32.xlu0 %v494, 96
    %v506 = vpop.permute.xlu0 %505
    %507 = vrot.lane.b32.xlu0 %v496, 96
    %v508 = vpop.permute.xlu0 %507
    %v513 = vmul.f32 %v469, %v502
    %v514 = vmul.f32 %v470, %v504
    %v515 = vmul.f32 %v471, %v506
    %v516 = vmul.f32 %v472, %v508
    %v517 = vpack.c.bf16 %v514, %v513
    %v518 = vpack.c.bf16 %v516, %v515
    %v520 = vlaneseq
    %v521 = vshrl.u32 %v520, 7
    %v522 = vsub.s32 0, %v521
    %v523 = vrot.slane %v276, %v522
    %v529 = vunpack.c.l.b16 %v272
    %v530 = vunpack.c.l.b16 %v273
    %v531 = vunpack.c.l.b16 %v274
    %v532 = vunpack.c.l.b16 %v275
    %v533 = vpack.c.b16 %v530, %v529
    %v534 = vpack.c.b16 %v532, %v531
    %v538 = vsel %vm359, %v517, 0
    %v541 = vsel %vm359, %v518, 0
    %543 = vmatprep.subr.bf16.mxu0 0
    %544 = vmatpush1.bf16.msra.mxu0 0
    %545 = vmatprep.subr.bf16.mxu0 0
    %546 = vmatpush1.bf16.msra.mxu0 0
    %547 = vmatprep.subr.bf16.mxu0 0
    %548 = vmatpush1.bf16.msra.mxu0 0
    %549 = vmatprep.subr.bf16.mxu0 0
    %550 = vmatpush1.bf16.msra.mxu0 0
    %551 = vmatprep.subr.bf16.mxu0 0
    %552 = vmatpush1.bf16.msra.mxu0 0
    %553 = vmatprep.subr.bf16.mxu0 0
    %554 = vmatpush1.bf16.msra.mxu0 0
    %555 = vmatprep.subr.bf16.mxu0 0
    %556 = vmatpush1.bf16.msra.mxu0 %v534
    %557 = vmatprep.subr.bf16.mxu0 0
    %558 = vmatpush1.bf16.msra.mxu0 %v533
    %559 = vmatprep.subr.bf16.mxu0 0
    %560 = vmatpush2.bf16.msra.mxu0 0
    %561 = vmatprep.subr.bf16.mxu0 0
    %562 = vmatpush2.bf16.msra.mxu0 0
    %563 = vmatprep.subr.bf16.mxu0 0
    %564 = vmatpush2.bf16.msra.mxu0 0
    %565 = vmatprep.subr.bf16.mxu0 0
    %566 = vmatpush2.bf16.msra.mxu0 0
    %567 = vmatprep.subr.bf16.mxu0 0
    %568 = vmatpush2.bf16.msra.mxu0 0
    %569 = vmatprep.subr.bf16.mxu0 0
    %570 = vmatpush2.bf16.msra.mxu0 0
    %571 = vmatprep.subr.bf16.mxu0 0
    %572 = vmatpush2.bf16.msra.mxu0 0
    %573 = vmatprep.subr.bf16.mxu0 0
    %574 = vmatpush2.bf16.msra.mxu0 0
    %575 = vmatprep.mubr.bf16.mxu0 0
    %576 = vmatmul.mubr.bf16.gmra.mxu0 %v538
    %v577 = vpop.f32.mrf.mxu0
    %v578 = vadd.f32 %v523, %v577
    %v579 = vpop.f32.mrf.mxu0
    %v580 = vpop.f32.mrf.mxu0
    %v581 = vadd.f32 %v523, %v580
    %v582 = vpop.f32.mrf.mxu0
    %583 = vmatprep.mubr.bf16.mxu0 0
    %584 = vmatmul.mubr.bf16.gmra.mxu0 %v541
    %v585 = vpop.f32.mrf.mxu0
    %v586 = vadd.f32 %v523, %v585
    %v587 = vpop.f32.mrf.mxu0
    %v588 = vpop.f32.mrf.mxu0
    %v589 = vadd.f32 %v523, %v588
    %v590 = vpop.f32.mrf.mxu0
    %591 = vdwg.mxu0
    %v592 = vadd.f32 %v578, 0.0
    %v593 = vadd.f32 %v581, 0.0
    %v594 = vadd.f32 %v586, 0.0
    %v595 = vadd.f32 %v589, 0.0
    %596 = vrot.lane.b32.xlu0 %v245, 32
    %v597 = vpop.permute.xlu0 %596
    %598 = vrot.lane.b32.xlu0 %v248, 32
    %v599 = vpop.permute.xlu0 %598
    %600 = vrot.lane.b32.xlu0 %v253, 32
    %v601 = vpop.permute.xlu0 %600
    %602 = vrot.lane.b32.xlu0 %v256, 32
    %v603 = vpop.permute.xlu0 %602
    %v608 = vadd.f32 %v578, %v597
    %v609 = vadd.f32 %v581, %v599
    %v610 = vadd.f32 %v586, %v601
    %v611 = vadd.f32 %v589, %v603
    %v612 = vld [vmem:[%s15] sm:$0xf]
    %v613 = vld [vmem:[%s15 + $0x4] sm:$0xf]
    %v614 = vld [vmem:[%s15 + $0x8] sm:$0xf]
    %v615 = vld [vmem:[%s15 + $0xc] sm:$0xf]
    %v616 = vld [vmem:[%s15 + $0x10] sm:$0xf]
    %v617 = vld [vmem:[%s15 + $0x14] sm:$0xf]
    %v618 = vld [vmem:[%s15 + $0x18] sm:$0xf]
    %v619 = vld [vmem:[%s15 + $0x1c] sm:$0xf]
    %v620 = vld [vmem:[%s15 + $0x20] sm:$0xf]
    %v621 = vld [vmem:[%s15 + $0x24] sm:$0xf]
    %v622 = vld [vmem:[%s15 + $0x28] sm:$0xf]
    %v623 = vld [vmem:[%s15 + $0x2c] sm:$0xf]
    %v624 = vld [vmem:[%s17] sm:$0x1]
    %v625 = vld [vmem:[%s19] sm:$0xf]
    %v626 = vld [vmem:[%s19 + $0x4] sm:$0xf]
    %v627 = vld [vmem:[%s19 + $0x8] sm:$0xf]
    %v628 = vld [vmem:[%s19 + $0xc] sm:$0xf]
    %v629 = vld [vmem:[%s21] sm:$0x1]
    %634 = vrot.lane.b32.xlu0 %v608, 96
    %v635 = vpop.permute.xlu0 %634
    %636 = vrot.lane.b32.xlu0 %v609, 96
    %v637 = vpop.permute.xlu0 %636
    %638 = vrot.lane.b32.xlu0 %v610, 96
    %v639 = vpop.permute.xlu0 %638
    %640 = vrot.lane.b32.xlu0 %v611, 96
    %v641 = vpop.permute.xlu0 %640
    %v646 = vrot.slane %v635, 4
    %v647 = vrot.slane %v637, 4
    %v648 = vrot.slane %v639, 4
    %v649 = vrot.slane %v641, 4
    %vm650 = vcmp.lt.s32.totalorder %v133, 4
    %v651 = vsel %vm650, %v648, %v649
    %v652 = vsel %vm650, %v647, %v648
    %v653 = vsel %vm650, %v646, %v647
    %v654 = vsel %vm650, %v649, %v646
    %vm655 = vcmp.ge.s32.totalorder %v181, 4
    %vm656 = vcmp.ge.s32.totalorder %v182, 4
    %vm657 = vcmp.ge.s32.totalorder %v183, 4
    %vm658 = vcmp.ge.s32.totalorder %v184, 4
    %v659 = vsel %vm655, 1, 0
    %v660 = vsel %vm656, 1, 0
    %v661 = vsel %vm657, 1, 0
    %v662 = vsel %vm658, 1, 0
    %vm663 = vcmp.eq.s32.totalorder %v659, 1
    %vm664 = vcmp.eq.s32.totalorder %v660, 1
    %vm665 = vcmp.eq.s32.totalorder %v661, 1
    %vm666 = vcmp.eq.s32.totalorder %v662, 1
    %v667 = vsel %vm663, %v654, 0.0
    %v668 = vsel %vm664, %v653, 0.0
    %v669 = vsel %vm665, %v652, 0.0
    %v670 = vsel %vm666, %v651, 0.0
    %v671 = vrot.slane %v635, 6
    %v672 = vrot.slane %v637, 6
    %v673 = vrot.slane %v639, 6
    %v674 = vrot.slane %v641, 6
    %v675 = vsel %vm281, %v673, %v674
    %v676 = vsel %vm281, %v672, %v673
    %v677 = vsel %vm281, %v671, %v672
    %v678 = vsel %vm281, %v674, %v671
    %v679 = vsel %vm294, %v678, 0.0
    %v680 = vsel %vm295, %v677, 0.0
    %v681 = vsel %vm296, %v676, 0.0
    %v682 = vsel %vm297, %v675, 0.0
    %687 = vrot.lane.b32.xlu0 %v679, 32
    %v688 = vpop.permute.xlu0 %687
    %689 = vrot.lane.b32.xlu0 %v680, 32
    %v690 = vpop.permute.xlu0 %689
    %691 = vrot.lane.b32.xlu0 %v681, 32
    %v692 = vpop.permute.xlu0 %691
    %693 = vrot.lane.b32.xlu0 %v682, 32
    %v694 = vpop.permute.xlu0 %693
    %699 = vrot.lane.b32.xlu0 %v608, 32
    %v700 = vpop.permute.xlu0 %699
    %701 = vrot.lane.b32.xlu0 %v609, 32
    %v702 = vpop.permute.xlu0 %701
    %703 = vrot.lane.b32.xlu0 %v610, 32
    %v704 = vpop.permute.xlu0 %703
    %705 = vrot.lane.b32.xlu0 %v611, 32
    %v706 = vpop.permute.xlu0 %705
    %v711 = vsel %vm359, %v667, %v688
    %v712 = vsel %vm359, %v668, %v690
    %v713 = vsel %vm359, %v669, %v692
    %v714 = vsel %vm359, %v670, %v694
    %v715 = vsel %vm364, %v711, %v700
    %v716 = vsel %vm364, %v712, %v702
    %v717 = vsel %vm364, %v713, %v704
    %v718 = vsel %vm364, %v714, %v706
    %v719 = vpack.c.bf16 %v716, %v715
    %v720 = vpack.c.bf16 %v718, %v717
    %v722 = vlaneseq
    %v723 = vshrl.u32 %v722, 7
    %v724 = vsub.s32 0, %v723
    %v725 = vrot.slane %v624, %v724
    %v739 = vunpack.c.l.b16 %v612
    %v740 = vunpack.c.l.b16 %v613
    %v741 = vunpack.c.l.b16 %v614
    %v742 = vunpack.c.l.b16 %v615
    %v743 = vunpack.c.l.b16 %v616
    %v744 = vunpack.c.l.b16 %v617
    %v745 = vunpack.c.l.b16 %v618
    %v746 = vunpack.c.l.b16 %v619
    %v747 = vunpack.c.l.b16 %v620
    %v748 = vunpack.c.l.b16 %v621
    %v749 = vunpack.c.l.b16 %v622
    %v750 = vunpack.c.l.b16 %v623
    %v751 = vpack.c.b16 %v740, %v739
    %v752 = vpack.c.b16 %v742, %v741
    %v753 = vpack.c.b16 %v744, %v743
    %v754 = vpack.c.b16 %v746, %v745
    %v755 = vpack.c.b16 %v748, %v747
    %v756 = vpack.c.b16 %v750, %v749
    %v764 = vsel %vm413, %v719, 0
    %v767 = vsel %vm413, %v720, 0
    %769 = vmatprep.subr.bf16.mxu0 0
    %770 = vmatpush1.bf16.msra.mxu0 0
    %771 = vmatprep.subr.bf16.mxu0 0
    %772 = vmatpush1.bf16.msra.mxu0 0
    %773 = vmatprep.subr.bf16.mxu0 0
    %774 = vmatpush1.bf16.msra.mxu0 %v756
    %775 = vmatprep.subr.bf16.mxu0 0
    %776 = vmatpush1.bf16.msra.mxu0 %v755
    %777 = vmatprep.subr.bf16.mxu0 0
    %778 = vmatpush1.bf16.msra.mxu0 %v754
    %779 = vmatprep.subr.bf16.mxu0 0
    %780 = vmatpush1.bf16.msra.mxu0 %v753
    %781 = vmatprep.subr.bf16.mxu0 0
    %782 = vmatpush1.bf16.msra.mxu0 %v752
    %783 = vmatprep.subr.bf16.mxu0 0
    %784 = vmatpush1.bf16.msra.mxu0 %v751
    %785 = vmatprep.subr.bf16.mxu0 0
    %786 = vmatpush2.bf16.msra.mxu0 0
    %787 = vmatprep.subr.bf16.mxu0 0
    %788 = vmatpush2.bf16.msra.mxu0 0
    %789 = vmatprep.subr.bf16.mxu0 0
    %790 = vmatpush2.bf16.msra.mxu0 0
    %791 = vmatprep.subr.bf16.mxu0 0
    %792 = vmatpush2.bf16.msra.mxu0 0
    %793 = vmatprep.subr.bf16.mxu0 0
    %794 = vmatpush2.bf16.msra.mxu0 0
    %795 = vmatprep.subr.bf16.mxu0 0
    %796 = vmatpush2.bf16.msra.mxu0 0
    %797 = vmatprep.subr.bf16.mxu0 0
    %798 = vmatpush2.bf16.msra.mxu0 0
    %799 = vmatprep.subr.bf16.mxu0 0
    %800 = vmatpush2.bf16.msra.mxu0 0
    %801 = vmatprep.mubr.bf16.mxu0 0
    %802 = vmatmul.mubr.bf16.gmra.mxu0 %v764
    %v803 = vpop.f32.mrf.mxu0
    %v804 = vadd.f32 %v725, %v803
    %v805 = vpop.f32.mrf.mxu0
    %v806 = vpop.f32.mrf.mxu0
    %v807 = vadd.f32 %v725, %v806
    %v808 = vpop.f32.mrf.mxu0
    %809 = vmatprep.mubr.bf16.mxu0 0
    %810 = vmatmul.mubr.bf16.gmra.mxu0 %v767
    %v811 = vpop.f32.mrf.mxu0
    %v812 = vadd.f32 %v725, %v811
    %v813 = vpop.f32.mrf.mxu0
    %v814 = vpop.f32.mrf.mxu0
    %v815 = vadd.f32 %v725, %v814
    %v816 = vpop.f32.mrf.mxu0
    %817 = vdwg.mxu0
    %v818 = vtanh.pop %v804
    %v819 = vtanh.pop %v807
    %v820 = vtanh.pop %v812
    %v821 = vtanh.pop %v815
    %v822 = vxor.u32 %v804, 2147483648
    %v823 = vxor.u32 %v807, 2147483648
    %v824 = vxor.u32 %v812, 2147483648
    %v825 = vxor.u32 %v815, 2147483648
    %v826 = vmul.f32 %v822, 1.442695
    %v827 = vpow.pop %v826
    %v828 = vmul.f32 %v823, 1.442695
    %v829 = vpow.pop %v828
    %v830 = vmul.f32 %v824, 1.442695
    %v831 = vpow.pop %v830
    %v832 = vmul.f32 %v825, 1.442695
    %v833 = vpow.pop %v832
    %v834 = vadd.f32 %v827, 1.0
    %v835 = vadd.f32 %v829, 1.0
    %v836 = vadd.f32 %v831, 1.0
    %v837 = vadd.f32 %v833, 1.0
    %v838 = vrcp.pop %v834
    %v839 = vmul.f32 1.0, %v838
    %v840 = vrcp.pop %v835
    %v841 = vmul.f32 1.0, %v840
    %v842 = vrcp.pop %v836
    %v843 = vmul.f32 1.0, %v842
    %v844 = vrcp.pop %v837
    %v845 = vmul.f32 1.0, %v844
    %850 = vrot.lane.b32.xlu0 %v839, 96
    %v851 = vpop.permute.xlu0 %850
    %852 = vrot.lane.b32.xlu0 %v841, 96
    %v853 = vpop.permute.xlu0 %852
    %854 = vrot.lane.b32.xlu0 %v843, 96
    %v855 = vpop.permute.xlu0 %854
    %856 = vrot.lane.b32.xlu0 %v845, 96
    %v857 = vpop.permute.xlu0 %856
    %v862 = vmul.f32 %v818, %v851
    %v863 = vmul.f32 %v819, %v853
    %v864 = vmul.f32 %v820, %v855
    %v865 = vmul.f32 %v821, %v857
    %v866 = vpack.c.bf16 %v863, %v862
    %v867 = vpack.c.bf16 %v865, %v864
    %v869 = vlaneseq
    %v870 = vshrl.u32 %v869, 7
    %v871 = vsub.s32 0, %v870
    %v872 = vrot.slane %v629, %v871
    %v878 = vunpack.c.l.b16 %v625
    %v879 = vunpack.c.l.b16 %v626
    %v880 = vunpack.c.l.b16 %v627
    %v881 = vunpack.c.l.b16 %v628
    %v882 = vpack.c.b16 %v879, %v878
    %v883 = vpack.c.b16 %v881, %v880
    %v887 = vsel %vm359, %v866, 0
    %v890 = vsel %vm359, %v867, 0
    %892 = vmatprep.subr.bf16.mxu0 0
    %893 = vmatpush1.bf16.msra.mxu0 0
    %894 = vmatprep.subr.bf16.mxu0 0
    %895 = vmatpush1.bf16.msra.mxu0 0
    %896 = vmatprep.subr.bf16.mxu0 0
    %897 = vmatpush1.bf16.msra.mxu0 0
    %898 = vmatprep.subr.bf16.mxu0 0
    %899 = vmatpush1.bf16.msra.mxu0 0
    %900 = vmatprep.subr.bf16.mxu0 0
    %901 = vmatpush1.bf16.msra.mxu0 0
    %902 = vmatprep.subr.bf16.mxu0 0
    %903 = vmatpush1.bf16.msra.mxu0 0
    %904 = vmatprep.subr.bf16.mxu0 0
    %905 = vmatpush1.bf16.msra.mxu0 %v883
    %906 = vmatprep.subr.bf16.mxu0 0
    %907 = vmatpush1.bf16.msra.mxu0 %v882
    %908 = vmatprep.subr.bf16.mxu0 0
    %909 = vmatpush2.bf16.msra.mxu0 0
    %910 = vmatprep.subr.bf16.mxu0 0
    %911 = vmatpush2.bf16.msra.mxu0 0
    %912 = vmatprep.subr.bf16.mxu0 0
    %913 = vmatpush2.bf16.msra.mxu0 0
    %914 = vmatprep.subr.bf16.mxu0 0
    %915 = vmatpush2.bf16.msra.mxu0 0
    %916 = vmatprep.subr.bf16.mxu0 0
    %917 = vmatpush2.bf16.msra.mxu0 0
    %918 = vmatprep.subr.bf16.mxu0 0
    %919 = vmatpush2.bf16.msra.mxu0 0
    %920 = vmatprep.subr.bf16.mxu0 0
    %921 = vmatpush2.bf16.msra.mxu0 0
    %922 = vmatprep.subr.bf16.mxu0 0
    %923 = vmatpush2.bf16.msra.mxu0 0
    %924 = vmatprep.mubr.bf16.mxu0 0
    %925 = vmatmul.mubr.bf16.gmra.mxu0 %v887
    %v926 = vpop.f32.mrf.mxu0
    %v927 = vadd.f32 %v872, %v926
    %v928 = vpop.f32.mrf.mxu0
    %v929 = vpop.f32.mrf.mxu0
    %v930 = vadd.f32 %v872, %v929
    %v931 = vpop.f32.mrf.mxu0
    %932 = vmatprep.mubr.bf16.mxu0 0
    %933 = vmatmul.mubr.bf16.gmra.mxu0 %v890
    %v934 = vpop.f32.mrf.mxu0
    %v935 = vadd.f32 %v872, %v934
    %v936 = vpop.f32.mrf.mxu0
    %v937 = vpop.f32.mrf.mxu0
    %v938 = vadd.f32 %v872, %v937
    %v939 = vpop.f32.mrf.mxu0
    %940 = vdwg.mxu0
    %v941 = vadd.f32 %v592, %v927
    %v942 = vadd.f32 %v593, %v930
    %v943 = vadd.f32 %v594, %v935
    %v944 = vadd.f32 %v595, %v938
    %v945 = vadd.f32 %v927, %v608
    %v946 = vadd.f32 %v930, %v609
    %v947 = vadd.f32 %v935, %v610
    %v948 = vadd.f32 %v938, %v611
    %v949 = vld [vmem:[%s23] sm:$0xf]
    %v950 = vld [vmem:[%s23 + $0x4] sm:$0xf]
    %v951 = vld [vmem:[%s23 + $0x8] sm:$0xf]
    %v952 = vld [vmem:[%s23 + $0xc] sm:$0xf]
    %v953 = vld [vmem:[%s23 + $0x10] sm:$0xf]
    %v954 = vld [vmem:[%s23 + $0x14] sm:$0xf]
    %v955 = vld [vmem:[%s23 + $0x18] sm:$0xf]
    %v956 = vld [vmem:[%s23 + $0x1c] sm:$0xf]
    %v957 = vld [vmem:[%s23 + $0x20] sm:$0xf]
    %v958 = vld [vmem:[%s23 + $0x24] sm:$0xf]
    %v959 = vld [vmem:[%s23 + $0x28] sm:$0xf]
    %v960 = vld [vmem:[%s23 + $0x2c] sm:$0xf]
    %v961 = vld [vmem:[%s25] sm:$0x1]
    %v962 = vld [vmem:[%s27] sm:$0xf]
    %v963 = vld [vmem:[%s27 + $0x4] sm:$0xf]
    %v964 = vld [vmem:[%s27 + $0x8] sm:$0xf]
    %v965 = vld [vmem:[%s27 + $0xc] sm:$0xf]
    %v966 = vld [vmem:[%s29] sm:$0x1]
    %971 = vrot.lane.b32.xlu0 %v945, 96
    %v972 = vpop.permute.xlu0 %971
    %973 = vrot.lane.b32.xlu0 %v946, 96
    %v974 = vpop.permute.xlu0 %973
    %975 = vrot.lane.b32.xlu0 %v947, 96
    %v976 = vpop.permute.xlu0 %975
    %977 = vrot.lane.b32.xlu0 %v948, 96
    %v978 = vpop.permute.xlu0 %977
    %vm983 = vcmp.ge.s32.totalorder %v181, 8
    %vm984 = vcmp.ge.s32.totalorder %v182, 8
    %vm985 = vcmp.ge.s32.totalorder %v183, 8
    %vm986 = vcmp.ge.s32.totalorder %v184, 8
    %v987 = vsel %vm983, 1, 0
    %v988 = vsel %vm984, 1, 0
    %v989 = vsel %vm985, 1, 0
    %v990 = vsel %vm986, 1, 0
    %vm991 = vcmp.eq.s32.totalorder %v987, 1
    %vm992 = vcmp.eq.s32.totalorder %v988, 1
    %vm993 = vcmp.eq.s32.totalorder %v989, 1
    %vm994 = vcmp.eq.s32.totalorder %v990, 1
    %v995 = vsel %vm991, %v978, 0.0
    %v996 = vsel %vm992, %v972, 0.0
    %v997 = vsel %vm993, %v974, 0.0
    %v998 = vsel %vm994, %v976, 0.0
    %v999 = vrot.slane %v972, 4
    %v1000 = vrot.slane %v974, 4
    %v1001 = vrot.slane %v976, 4
    %v1002 = vrot.slane %v978, 4
    %v1003 = vsel %vm650, %v1001, %v1002
    %v1004 = vsel %vm650, %v1000, %v1001
    %v1005 = vsel %vm650, %v999, %v1000
    %v1006 = vsel %vm650, %v1002, %v999
    %v1007 = vsel %vm663, %v1006, 0.0
    %v1008 = vsel %vm664, %v1005, 0.0
    %v1009 = vsel %vm665, %v1004, 0.0
    %v1010 = vsel %vm666, %v1003, 0.0
    %1015 = vrot.lane.b32.xlu0 %v1007, 32
    %v1016 = vpop.permute.xlu0 %1015
    %1017 = vrot.lane.b32.xlu0 %v1008, 32
    %v1018 = vpop.permute.xlu0 %1017
    %1019 = vrot.lane.b32.xlu0 %v1009, 32
    %v1020 = vpop.permute.xlu0 %1019
    %1021 = vrot.lane.b32.xlu0 %v1010, 32
    %v1022 = vpop.permute.xlu0 %1021
    %1027 = vrot.lane.b32.xlu0 %v945, 32
    %v1028 = vpop.permute.xlu0 %1027
    %1029 = vrot.lane.b32.xlu0 %v946, 32
    %v1030 = vpop.permute.xlu0 %1029
    %1031 = vrot.lane.b32.xlu0 %v947, 32
    %v1032 = vpop.permute.xlu0 %1031
    %1033 = vrot.lane.b32.xlu0 %v948, 32
    %v1034 = vpop.permute.xlu0 %1033
    %v1039 = vsel %vm359, %v995, %v1016
    %v1040 = vsel %vm359, %v996, %v1018
    %v1041 = vsel %vm359, %v997, %v1020
    %v1042 = vsel %vm359, %v998, %v1022
    %v1043 = vsel %vm364, %v1039, %v1028
    %v1044 = vsel %vm364, %v1040, %v1030
    %v1045 = vsel %vm364, %v1041, %v1032
    %v1046 = vsel %vm364, %v1042, %v1034
    %v1047 = vpack.c.bf16 %v1044, %v1043
    %v1048 = vpack.c.bf16 %v1046, %v1045
    %v1050 = vlaneseq
    %v1051 = vshrl.u32 %v1050, 7
    %v1052 = vsub.s32 0, %v1051
    %v1053 = vrot.slane %v961, %v1052
    %v1067 = vunpack.c.l.b16 %v949
    %v1068 = vunpack.c.l.b16 %v950
    %v1069 = vunpack.c.l.b16 %v951
    %v1070 = vunpack.c.l.b16 %v952
    %v1071 = vunpack.c.l.b16 %v953
    %v1072 = vunpack.c.l.b16 %v954
    %v1073 = vunpack.c.l.b16 %v955
    %v1074 = vunpack.c.l.b16 %v956
    %v1075 = vunpack.c.l.b16 %v957
    %v1076 = vunpack.c.l.b16 %v958
    %v1077 = vunpack.c.l.b16 %v959
    %v1078 = vunpack.c.l.b16 %v960
    %v1079 = vpack.c.b16 %v1068, %v1067
    %v1080 = vpack.c.b16 %v1070, %v1069
    %v1081 = vpack.c.b16 %v1072, %v1071
    %v1082 = vpack.c.b16 %v1074, %v1073
    %v1083 = vpack.c.b16 %v1076, %v1075
    %v1084 = vpack.c.b16 %v1078, %v1077
    %v1092 = vsel %vm413, %v1047, 0
    %v1095 = vsel %vm413, %v1048, 0
    %1097 = vmatprep.subr.bf16.mxu0 0
    %1098 = vmatpush1.bf16.msra.mxu0 0
    %1099 = vmatprep.subr.bf16.mxu0 0
    %1100 = vmatpush1.bf16.msra.mxu0 0
    %1101 = vmatprep.subr.bf16.mxu0 0
    %1102 = vmatpush1.bf16.msra.mxu0 %v1084
    %1103 = vmatprep.subr.bf16.mxu0 0
    %1104 = vmatpush1.bf16.msra.mxu0 %v1083
    %1105 = vmatprep.subr.bf16.mxu0 0
    %1106 = vmatpush1.bf16.msra.mxu0 %v1082
    %1107 = vmatprep.subr.bf16.mxu0 0
    %1108 = vmatpush1.bf16.msra.mxu0 %v1081
    %1109 = vmatprep.subr.bf16.mxu0 0
    %1110 = vmatpush1.bf16.msra.mxu0 %v1080
    %1111 = vmatprep.subr.bf16.mxu0 0
    %1112 = vmatpush1.bf16.msra.mxu0 %v1079
    %1113 = vmatprep.subr.bf16.mxu0 0
    %1114 = vmatpush2.bf16.msra.mxu0 0
    %1115 = vmatprep.subr.bf16.mxu0 0
    %1116 = vmatpush2.bf16.msra.mxu0 0
    %1117 = vmatprep.subr.bf16.mxu0 0
    %1118 = vmatpush2.bf16.msra.mxu0 0
    %1119 = vmatprep.subr.bf16.mxu0 0
    %1120 = vmatpush2.bf16.msra.mxu0 0
    %1121 = vmatprep.subr.bf16.mxu0 0
    %1122 = vmatpush2.bf16.msra.mxu0 0
    %1123 = vmatprep.subr.bf16.mxu0 0
    %1124 = vmatpush2.bf16.msra.mxu0 0
    %1125 = vmatprep.subr.bf16.mxu0 0
    %1126 = vmatpush2.bf16.msra.mxu0 0
    %1127 = vmatprep.subr.bf16.mxu0 0
    %1128 = vmatpush2.bf16.msra.mxu0 0
    %1129 = vmatprep.mubr.bf16.mxu0 0
    %1130 = vmatmul.mubr.bf16.gmra.mxu0 %v1092
    %v1131 = vpop.f32.mrf.mxu0
    %v1132 = vadd.f32 %v1053, %v1131
    %v1133 = vpop.f32.mrf.mxu0
    %v1134 = vpop.f32.mrf.mxu0
    %v1135 = vadd.f32 %v1053, %v1134
    %v1136 = vpop.f32.mrf.mxu0
    %1137 = vmatprep.mubr.bf16.mxu0 0
    %1138 = vmatmul.mubr.bf16.gmra.mxu0 %v1095
    %v1139 = vpop.f32.mrf.mxu0
    %v1140 = vadd.f32 %v1053, %v1139
    %v1141 = vpop.f32.mrf.mxu0
    %v1142 = vpop.f32.mrf.mxu0
    %v1143 = vadd.f32 %v1053, %v1142
    %v1144 = vpop.f32.mrf.mxu0
    %1145 = vdwg.mxu0
    %v1146 = vtanh.pop %v1132
    %v1147 = vtanh.pop %v1135
    %v1148 = vtanh.pop %v1140
    %v1149 = vtanh.pop %v1143
    %v1150 = vxor.u32 %v1132, 2147483648
    %v1151 = vxor.u32 %v1135, 2147483648
    %v1152 = vxor.u32 %v1140, 2147483648
    %v1153 = vxor.u32 %v1143, 2147483648
    %v1154 = vmul.f32 %v1150, 1.442695
    %v1155 = vpow.pop %v1154
    %v1156 = vmul.f32 %v1151, 1.442695
    %v1157 = vpow.pop %v1156
    %v1158 = vmul.f32 %v1152, 1.442695
    %v1159 = vpow.pop %v1158
    %v1160 = vmul.f32 %v1153, 1.442695
    %v1161 = vpow.pop %v1160
    %v1162 = vadd.f32 %v1155, 1.0
    %v1163 = vadd.f32 %v1157, 1.0
    %v1164 = vadd.f32 %v1159, 1.0
    %v1165 = vadd.f32 %v1161, 1.0
    %v1166 = vrcp.pop %v1162
    %v1167 = vmul.f32 1.0, %v1166
    %v1168 = vrcp.pop %v1163
    %v1169 = vmul.f32 1.0, %v1168
    %v1170 = vrcp.pop %v1164
    %v1171 = vmul.f32 1.0, %v1170
    %v1172 = vrcp.pop %v1165
    %v1173 = vmul.f32 1.0, %v1172
    %1178 = vrot.lane.b32.xlu0 %v1167, 96
    %v1179 = vpop.permute.xlu0 %1178
    %1180 = vrot.lane.b32.xlu0 %v1169, 96
    %v1181 = vpop.permute.xlu0 %1180
    %1182 = vrot.lane.b32.xlu0 %v1171, 96
    %v1183 = vpop.permute.xlu0 %1182
    %1184 = vrot.lane.b32.xlu0 %v1173, 96
    %v1185 = vpop.permute.xlu0 %1184
    %v1190 = vmul.f32 %v1146, %v1179
    %v1191 = vmul.f32 %v1147, %v1181
    %v1192 = vmul.f32 %v1148, %v1183
    %v1193 = vmul.f32 %v1149, %v1185
    %v1194 = vpack.c.bf16 %v1191, %v1190
    %v1195 = vpack.c.bf16 %v1193, %v1192
    %v1197 = vlaneseq
    %v1198 = vshrl.u32 %v1197, 7
    %v1199 = vsub.s32 0, %v1198
    %v1200 = vrot.slane %v966, %v1199
    %v1206 = vunpack.c.l.b16 %v962
    %v1207 = vunpack.c.l.b16 %v963
    %v1208 = vunpack.c.l.b16 %v964
    %v1209 = vunpack.c.l.b16 %v965
    %v1210 = vpack.c.b16 %v1207, %v1206
    %v1211 = vpack.c.b16 %v1209, %v1208
    %v1215 = vsel %vm359, %v1194, 0
    %v1218 = vsel %vm359, %v1195, 0
    %1220 = vmatprep.subr.bf16.mxu0 0
    %1221 = vmatpush1.bf16.msra.mxu0 0
    %1222 = vmatprep.subr.bf16.mxu0 0
    %1223 = vmatpush1.bf16.msra.mxu0 0
    %1224 = vmatprep.subr.bf16.mxu0 0
    %1225 = vmatpush1.bf16.msra.mxu0 0
    %1226 = vmatprep.subr.bf16.mxu0 0
    %1227 = vmatpush1.bf16.msra.mxu0 0
    %1228 = vmatprep.subr.bf16.mxu0 0
    %1229 = vmatpush1.bf16.msra.mxu0 0
    %1230 = vmatprep.subr.bf16.mxu0 0
    %1231 = vmatpush1.bf16.msra.mxu0 0
    %1232 = vmatprep.subr.bf16.mxu0 0
    %1233 = vmatpush1.bf16.msra.mxu0 %v1211
    %1234 = vmatprep.subr.bf16.mxu0 0
    %1235 = vmatpush1.bf16.msra.mxu0 %v1210
    %1236 = vmatprep.subr.bf16.mxu0 0
    %1237 = vmatpush2.bf16.msra.mxu0 0
    %1238 = vmatprep.subr.bf16.mxu0 0
    %1239 = vmatpush2.bf16.msra.mxu0 0
    %1240 = vmatprep.subr.bf16.mxu0 0
    %1241 = vmatpush2.bf16.msra.mxu0 0
    %1242 = vmatprep.subr.bf16.mxu0 0
    %1243 = vmatpush2.bf16.msra.mxu0 0
    %1244 = vmatprep.subr.bf16.mxu0 0
    %1245 = vmatpush2.bf16.msra.mxu0 0
    %1246 = vmatprep.subr.bf16.mxu0 0
    %1247 = vmatpush2.bf16.msra.mxu0 0
    %1248 = vmatprep.subr.bf16.mxu0 0
    %1249 = vmatpush2.bf16.msra.mxu0 0
    %1250 = vmatprep.subr.bf16.mxu0 0
    %1251 = vmatpush2.bf16.msra.mxu0 0
    %1252 = vmatprep.mubr.bf16.mxu0 0
    %1253 = vmatmul.mubr.bf16.gmra.mxu0 %v1215
    %v1254 = vpop.f32.mrf.mxu0
    %v1255 = vadd.f32 %v1200, %v1254
    %v1256 = vpop.f32.mrf.mxu0
    %v1257 = vpop.f32.mrf.mxu0
    %v1258 = vadd.f32 %v1200, %v1257
    %v1259 = vpop.f32.mrf.mxu0
    %1260 = vmatprep.mubr.bf16.mxu0 0
    %1261 = vmatmul.mubr.bf16.gmra.mxu0 %v1218
    %v1262 = vpop.f32.mrf.mxu0
    %v1263 = vadd.f32 %v1200, %v1262
    %v1264 = vpop.f32.mrf.mxu0
    %v1265 = vpop.f32.mrf.mxu0
    %v1266 = vadd.f32 %v1200, %v1265
    %v1267 = vpop.f32.mrf.mxu0
    %1268 = vdwg.mxu0
    %v1269 = vadd.f32 %v941, %v1255
    %v1270 = vadd.f32 %v942, %v1258
    %v1271 = vadd.f32 %v943, %v1263
    %v1272 = vadd.f32 %v944, %v1266
    %v1273 = vadd.f32 %v1255, %v945
    %v1274 = vadd.f32 %v1258, %v946
    %v1275 = vadd.f32 %v1263, %v947
    %v1276 = vadd.f32 %v1266, %v948
    %v1277 = vld [vmem:[%s31] sm:$0xf]
    %v1278 = vld [vmem:[%s31 + $0x4] sm:$0xf]
    %v1279 = vld [vmem:[%s31 + $0x8] sm:$0xf]
    %v1280 = vld [vmem:[%s31 + $0xc] sm:$0xf]
    %v1281 = vld [vmem:[%s31 + $0x10] sm:$0xf]
    %v1282 = vld [vmem:[%s31 + $0x14] sm:$0xf]
    %v1283 = vld [vmem:[%s31 + $0x18] sm:$0xf]
    %v1284 = vld [vmem:[%s31 + $0x1c] sm:$0xf]
    %v1285 = vld [vmem:[%s31 + $0x20] sm:$0xf]
    %v1286 = vld [vmem:[%s31 + $0x24] sm:$0xf]
    %v1287 = vld [vmem:[%s31 + $0x28] sm:$0xf]
    %v1288 = vld [vmem:[%s31 + $0x2c] sm:$0xf]
    %v1289 = vld [vmem:[%s33] sm:$0x1]
    %v1290 = vld [vmem:[%s35] sm:$0xf]
    %v1291 = vld [vmem:[%s35 + $0x4] sm:$0xf]
    %v1292 = vld [vmem:[%s35 + $0x8] sm:$0xf]
    %v1293 = vld [vmem:[%s35 + $0xc] sm:$0xf]
    %v1294 = vld [vmem:[%s37] sm:$0x1]
    %1299 = vrot.lane.b32.xlu0 %v1273, 96
    %v1300 = vpop.permute.xlu0 %1299
    %1301 = vrot.lane.b32.xlu0 %v1274, 96
    %v1302 = vpop.permute.xlu0 %1301
    %1303 = vrot.lane.b32.xlu0 %v1275, 96
    %v1304 = vpop.permute.xlu0 %1303
    %1305 = vrot.lane.b32.xlu0 %v1276, 96
    %v1306 = vpop.permute.xlu0 %1305
    %v1311 = vrot.slane %v1300, 6
    %v1312 = vrot.slane %v1302, 6
    %v1313 = vrot.slane %v1304, 6
    %v1314 = vrot.slane %v1306, 6
    %v1315 = vsel %vm281, %v1313, %v1314
    %v1316 = vsel %vm281, %v1312, %v1313
    %v1317 = vsel %vm281, %v1311, %v1312
    %v1318 = vsel %vm281, %v1314, %v1311
    %v1319 = vsel %vm294, %v1318, 0.0
    %v1320 = vsel %vm295, %v1317, 0.0
    %v1321 = vsel %vm296, %v1316, 0.0
    %v1322 = vsel %vm297, %v1315, 0.0
    %v1323 = vrot.slane %v1300, 7
    %v1324 = vrot.slane %v1302, 7
    %v1325 = vrot.slane %v1304, 7
    %v1326 = vrot.slane %v1306, 7
    %v1327 = vsel %vm306, %v1325, %v1326
    %v1328 = vsel %vm306, %v1324, %v1325
    %v1329 = vsel %vm306, %v1323, %v1324
    %v1330 = vsel %vm306, %v1326, %v1323
    %v1331 = vsel %vm319, %v1330, 0.0
    %v1332 = vsel %vm320, %v1329, 0.0
    %v1333 = vsel %vm321, %v1328, 0.0
    %v1334 = vsel %vm322, %v1327, 0.0
    %1339 = vrot.lane.b32.xlu0 %v1331, 32
    %v1340 = vpop.permute.xlu0 %1339
    %1341 = vrot.lane.b32.xlu0 %v1332, 32
    %v1342 = vpop.permute.xlu0 %1341
    %1343 = vrot.lane.b32.xlu0 %v1333, 32
    %v1344 = vpop.permute.xlu0 %1343
    %1345 = vrot.lane.b32.xlu0 %v1334, 32
    %v1346 = vpop.permute.xlu0 %1345
    %1351 = vrot.lane.b32.xlu0 %v1273, 32
    %v1352 = vpop.permute.xlu0 %1351
    %1353 = vrot.lane.b32.xlu0 %v1274, 32
    %v1354 = vpop.permute.xlu0 %1353
    %1355 = vrot.lane.b32.xlu0 %v1275, 32
    %v1356 = vpop.permute.xlu0 %1355
    %1357 = vrot.lane.b32.xlu0 %v1276, 32
    %v1358 = vpop.permute.xlu0 %1357
    %v1363 = vsel %vm359, %v1319, %v1340
    %v1364 = vsel %vm359, %v1320, %v1342
    %v1365 = vsel %vm359, %v1321, %v1344
    %v1366 = vsel %vm359, %v1322, %v1346
    %v1367 = vsel %vm364, %v1363, %v1352
    %v1368 = vsel %vm364, %v1364, %v1354
    %v1369 = vsel %vm364, %v1365, %v1356
    %v1370 = vsel %vm364, %v1366, %v1358
    %v1371 = vpack.c.bf16 %v1368, %v1367
    %v1372 = vpack.c.bf16 %v1370, %v1369
    %v1374 = vlaneseq
    %v1375 = vshrl.u32 %v1374, 7
    %v1376 = vsub.s32 0, %v1375
    %v1377 = vrot.slane %v1289, %v1376
    %v1391 = vunpack.c.l.b16 %v1277
    %v1392 = vunpack.c.l.b16 %v1278
    %v1393 = vunpack.c.l.b16 %v1279
    %v1394 = vunpack.c.l.b16 %v1280
    %v1395 = vunpack.c.l.b16 %v1281
    %v1396 = vunpack.c.l.b16 %v1282
    %v1397 = vunpack.c.l.b16 %v1283
    %v1398 = vunpack.c.l.b16 %v1284
    %v1399 = vunpack.c.l.b16 %v1285
    %v1400 = vunpack.c.l.b16 %v1286
    %v1401 = vunpack.c.l.b16 %v1287
    %v1402 = vunpack.c.l.b16 %v1288
    %v1403 = vpack.c.b16 %v1392, %v1391
    %v1404 = vpack.c.b16 %v1394, %v1393
    %v1405 = vpack.c.b16 %v1396, %v1395
    %v1406 = vpack.c.b16 %v1398, %v1397
    %v1407 = vpack.c.b16 %v1400, %v1399
    %v1408 = vpack.c.b16 %v1402, %v1401
    %v1416 = vsel %vm413, %v1371, 0
    %v1419 = vsel %vm413, %v1372, 0
    %1421 = vmatprep.subr.bf16.mxu0 0
    %1422 = vmatpush1.bf16.msra.mxu0 0
    %1423 = vmatprep.subr.bf16.mxu0 0
    %1424 = vmatpush1.bf16.msra.mxu0 0
    %1425 = vmatprep.subr.bf16.mxu0 0
    %1426 = vmatpush1.bf16.msra.mxu0 %v1408
    %1427 = vmatprep.subr.bf16.mxu0 0
    %1428 = vmatpush1.bf16.msra.mxu0 %v1407
    %1429 = vmatprep.subr.bf16.mxu0 0
    %1430 = vmatpush1.bf16.msra.mxu0 %v1406
    %1431 = vmatprep.subr.bf16.mxu0 0
    %1432 = vmatpush1.bf16.msra.mxu0 %v1405
    %1433 = vmatprep.subr.bf16.mxu0 0
    %1434 = vmatpush1.bf16.msra.mxu0 %v1404
    %1435 = vmatprep.subr.bf16.mxu0 0
    %1436 = vmatpush1.bf16.msra.mxu0 %v1403
    %1437 = vmatprep.subr.bf16.mxu0 0
    %1438 = vmatpush2.bf16.msra.mxu0 0
    %1439 = vmatprep.subr.bf16.mxu0 0
    %1440 = vmatpush2.bf16.msra.mxu0 0
    %1441 = vmatprep.subr.bf16.mxu0 0
    %1442 = vmatpush2.bf16.msra.mxu0 0
    %1443 = vmatprep.subr.bf16.mxu0 0
    %1444 = vmatpush2.bf16.msra.mxu0 0
    %1445 = vmatprep.subr.bf16.mxu0 0
    %1446 = vmatpush2.bf16.msra.mxu0 0
    %1447 = vmatprep.subr.bf16.mxu0 0
    %1448 = vmatpush2.bf16.msra.mxu0 0
    %1449 = vmatprep.subr.bf16.mxu0 0
    %1450 = vmatpush2.bf16.msra.mxu0 0
    %1451 = vmatprep.subr.bf16.mxu0 0
    %1452 = vmatpush2.bf16.msra.mxu0 0
    %1453 = vmatprep.mubr.bf16.mxu0 0
    %1454 = vmatmul.mubr.bf16.gmra.mxu0 %v1416
    %v1455 = vpop.f32.mrf.mxu0
    %v1456 = vadd.f32 %v1377, %v1455
    %v1457 = vpop.f32.mrf.mxu0
    %v1458 = vpop.f32.mrf.mxu0
    %v1459 = vadd.f32 %v1377, %v1458
    %v1460 = vpop.f32.mrf.mxu0
    %1461 = vmatprep.mubr.bf16.mxu0 0
    %1462 = vmatmul.mubr.bf16.gmra.mxu0 %v1419
    %v1463 = vpop.f32.mrf.mxu0
    %v1464 = vadd.f32 %v1377, %v1463
    %v1465 = vpop.f32.mrf.mxu0
    %v1466 = vpop.f32.mrf.mxu0
    %v1467 = vadd.f32 %v1377, %v1466
    %v1468 = vpop.f32.mrf.mxu0
    %1469 = vdwg.mxu0
    %v1470 = vtanh.pop %v1456
    %v1471 = vtanh.pop %v1459
    %v1472 = vtanh.pop %v1464
    %v1473 = vtanh.pop %v1467
    %v1474 = vxor.u32 %v1456, 2147483648
    %v1475 = vxor.u32 %v1459, 2147483648
    %v1476 = vxor.u32 %v1464, 2147483648
    %v1477 = vxor.u32 %v1467, 2147483648
    %v1478 = vmul.f32 %v1474, 1.442695
    %v1479 = vpow.pop %v1478
    %v1480 = vmul.f32 %v1475, 1.442695
    %v1481 = vpow.pop %v1480
    %v1482 = vmul.f32 %v1476, 1.442695
    %v1483 = vpow.pop %v1482
    %v1484 = vmul.f32 %v1477, 1.442695
    %v1485 = vpow.pop %v1484
    %v1486 = vadd.f32 %v1479, 1.0
    %v1487 = vadd.f32 %v1481, 1.0
    %v1488 = vadd.f32 %v1483, 1.0
    %v1489 = vadd.f32 %v1485, 1.0
    %v1490 = vrcp.pop %v1486
    %v1491 = vmul.f32 1.0, %v1490
    %v1492 = vrcp.pop %v1487
    %v1493 = vmul.f32 1.0, %v1492
    %v1494 = vrcp.pop %v1488
    %v1495 = vmul.f32 1.0, %v1494
    %v1496 = vrcp.pop %v1489
    %v1497 = vmul.f32 1.0, %v1496
    %1502 = vrot.lane.b32.xlu0 %v1491, 96
    %v1503 = vpop.permute.xlu0 %1502
    %1504 = vrot.lane.b32.xlu0 %v1493, 96
    %v1505 = vpop.permute.xlu0 %1504
    %1506 = vrot.lane.b32.xlu0 %v1495, 96
    %v1507 = vpop.permute.xlu0 %1506
    %1508 = vrot.lane.b32.xlu0 %v1497, 96
    %v1509 = vpop.permute.xlu0 %1508
    %v1514 = vmul.f32 %v1470, %v1503
    %v1515 = vmul.f32 %v1471, %v1505
    %v1516 = vmul.f32 %v1472, %v1507
    %v1517 = vmul.f32 %v1473, %v1509
    %v1518 = vpack.c.bf16 %v1515, %v1514
    %v1519 = vpack.c.bf16 %v1517, %v1516
    %v1521 = vlaneseq
    %v1522 = vshrl.u32 %v1521, 7
    %v1523 = vsub.s32 0, %v1522
    %v1524 = vrot.slane %v1294, %v1523
    %v1530 = vunpack.c.l.b16 %v1290
    %v1531 = vunpack.c.l.b16 %v1291
    %v1532 = vunpack.c.l.b16 %v1292
    %v1533 = vunpack.c.l.b16 %v1293
    %v1534 = vpack.c.b16 %v1531, %v1530
    %v1535 = vpack.c.b16 %v1533, %v1532
    %v1539 = vsel %vm359, %v1518, 0
    %v1542 = vsel %vm359, %v1519, 0
    %1544 = vmatprep.subr.bf16.mxu0 0
    %1545 = vmatpush1.bf16.msra.mxu0 0
    %1546 = vmatprep.subr.bf16.mxu0 0
    %1547 = vmatpush1.bf16.msra.mxu0 0
    %1548 = vmatprep.subr.bf16.mxu0 0
    %1549 = vmatpush1.bf16.msra.mxu0 0
    %1550 = vmatprep.subr.bf16.mxu0 0
    %1551 = vmatpush1.bf16.msra.mxu0 0
    %1552 = vmatprep.subr.bf16.mxu0 0
    %1553 = vmatpush1.bf16.msra.mxu0 0
    %1554 = vmatprep.subr.bf16.mxu0 0
    %1555 = vmatpush1.bf16.msra.mxu0 0
    %1556 = vmatprep.subr.bf16.mxu0 0
    %1557 = vmatpush1.bf16.msra.mxu0 %v1535
    %1558 = vmatprep.subr.bf16.mxu0 0
    %1559 = vmatpush1.bf16.msra.mxu0 %v1534
    %1560 = vmatprep.subr.bf16.mxu0 0
    %1561 = vmatpush2.bf16.msra.mxu0 0
    %1562 = vmatprep.subr.bf16.mxu0 0
    %1563 = vmatpush2.bf16.msra.mxu0 0
    %1564 = vmatprep.subr.bf16.mxu0 0
    %1565 = vmatpush2.bf16.msra.mxu0 0
    %1566 = vmatprep.subr.bf16.mxu0 0
    %1567 = vmatpush2.bf16.msra.mxu0 0
    %1568 = vmatprep.subr.bf16.mxu0 0
    %1569 = vmatpush2.bf16.msra.mxu0 0
    %1570 = vmatprep.subr.bf16.mxu0 0
    %1571 = vmatpush2.bf16.msra.mxu0 0
    %1572 = vmatprep.subr.bf16.mxu0 0
    %1573 = vmatpush2.bf16.msra.mxu0 0
    %1574 = vmatprep.subr.bf16.mxu0 0
    %1575 = vmatpush2.bf16.msra.mxu0 0
    %1576 = vmatprep.mubr.bf16.mxu0 0
    %1577 = vmatmul.mubr.bf16.gmra.mxu0 %v1539
    %v1578 = vpop.f32.mrf.mxu0
    %v1579 = vadd.f32 %v1524, %v1578
    %v1580 = vpop.f32.mrf.mxu0
    %v1581 = vpop.f32.mrf.mxu0
    %v1582 = vadd.f32 %v1524, %v1581
    %v1583 = vpop.f32.mrf.mxu0
    %1584 = vmatprep.mubr.bf16.mxu0 0
    %1585 = vmatmul.mubr.bf16.gmra.mxu0 %v1542
    %v1586 = vpop.f32.mrf.mxu0
    %v1587 = vadd.f32 %v1524, %v1586
    %v1588 = vpop.f32.mrf.mxu0
    %v1589 = vpop.f32.mrf.mxu0
    %v1590 = vadd.f32 %v1524, %v1589
    %v1591 = vpop.f32.mrf.mxu0
    %1592 = vdwg.mxu0
    %v1593 = vadd.f32 %v1269, %v1579
    %v1594 = vadd.f32 %v1270, %v1582
    %v1595 = vadd.f32 %v1271, %v1587
    %v1596 = vadd.f32 %v1272, %v1590
    %v1597 = vadd.f32 %v1579, %v1273
    %v1598 = vadd.f32 %v1582, %v1274
    %v1599 = vadd.f32 %v1587, %v1275
    %v1600 = vadd.f32 %v1590, %v1276
    %v1601 = vld [vmem:[%s39] sm:$0xf]
    %v1602 = vld [vmem:[%s39 + $0x4] sm:$0xf]
    %v1603 = vld [vmem:[%s39 + $0x8] sm:$0xf]
    %v1604 = vld [vmem:[%s39 + $0xc] sm:$0xf]
    %v1605 = vld [vmem:[%s39 + $0x10] sm:$0xf]
    %v1606 = vld [vmem:[%s39 + $0x14] sm:$0xf]
    %v1607 = vld [vmem:[%s39 + $0x18] sm:$0xf]
    %v1608 = vld [vmem:[%s39 + $0x1c] sm:$0xf]
    %v1609 = vld [vmem:[%s39 + $0x20] sm:$0xf]
    %v1610 = vld [vmem:[%s39 + $0x24] sm:$0xf]
    %v1611 = vld [vmem:[%s39 + $0x28] sm:$0xf]
    %v1612 = vld [vmem:[%s39 + $0x2c] sm:$0xf]
    %v1613 = vld [vmem:[%s41] sm:$0x1]
    %v1614 = vld [vmem:[%s43] sm:$0xf]
    %v1615 = vld [vmem:[%s43 + $0x4] sm:$0xf]
    %v1616 = vld [vmem:[%s43 + $0x8] sm:$0xf]
    %v1617 = vld [vmem:[%s43 + $0xc] sm:$0xf]
    %v1618 = vld [vmem:[%s45] sm:$0x1]
    %1623 = vrot.lane.b32.xlu0 %v1597, 96
    %v1624 = vpop.permute.xlu0 %1623
    %1625 = vrot.lane.b32.xlu0 %v1598, 96
    %v1626 = vpop.permute.xlu0 %1625
    %1627 = vrot.lane.b32.xlu0 %v1599, 96
    %v1628 = vpop.permute.xlu0 %1627
    %1629 = vrot.lane.b32.xlu0 %v1600, 96
    %v1630 = vpop.permute.xlu0 %1629
    %v1635 = vrot.slane %v1624, 4
    %v1636 = vrot.slane %v1626, 4
    %v1637 = vrot.slane %v1628, 4
    %v1638 = vrot.slane %v1630, 4
    %v1639 = vsel %vm650, %v1637, %v1638
    %v1640 = vsel %vm650, %v1636, %v1637
    %v1641 = vsel %vm650, %v1635, %v1636
    %v1642 = vsel %vm650, %v1638, %v1635
    %v1643 = vsel %vm663, %v1642, 0.0
    %v1644 = vsel %vm664, %v1641, 0.0
    %v1645 = vsel %vm665, %v1640, 0.0
    %v1646 = vsel %vm666, %v1639, 0.0
    %v1647 = vrot.slane %v1624, 6
    %v1648 = vrot.slane %v1626, 6
    %v1649 = vrot.slane %v1628, 6
    %v1650 = vrot.slane %v1630, 6
    %v1651 = vsel %vm281, %v1649, %v1650
    %v1652 = vsel %vm281, %v1648, %v1649
    %v1653 = vsel %vm281, %v1647, %v1648
    %v1654 = vsel %vm281, %v1650, %v1647
    %v1655 = vsel %vm294, %v1654, 0.0
    %v1656 = vsel %vm295, %v1653, 0.0
    %v1657 = vsel %vm296, %v1652, 0.0
    %v1658 = vsel %vm297, %v1651, 0.0
    %1663 = vrot.lane.b32.xlu0 %v1655, 32
    %v1664 = vpop.permute.xlu0 %1663
    %1665 = vrot.lane.b32.xlu0 %v1656, 32
    %v1666 = vpop.permute.xlu0 %1665
    %1667 = vrot.lane.b32.xlu0 %v1657, 32
    %v1668 = vpop.permute.xlu0 %1667
    %1669 = vrot.lane.b32.xlu0 %v1658, 32
    %v1670 = vpop.permute.xlu0 %1669
    %1675 = vrot.lane.b32.xlu0 %v1597, 32
    %v1676 = vpop.permute.xlu0 %1675
    %1677 = vrot.lane.b32.xlu0 %v1598, 32
    %v1678 = vpop.permute.xlu0 %1677
    %1679 = vrot.lane.b32.xlu0 %v1599, 32
    %v1680 = vpop.permute.xlu0 %1679
    %1681 = vrot.lane.b32.xlu0 %v1600, 32
    %v1682 = vpop.permute.xlu0 %1681
    %v1687 = vsel %vm359, %v1643, %v1664
    %v1688 = vsel %vm359, %v1644, %v1666
    %v1689 = vsel %vm359, %v1645, %v1668
    %v1690 = vsel %vm359, %v1646, %v1670
    %v1691 = vsel %vm364, %v1687, %v1676
    %v1692 = vsel %vm364, %v1688, %v1678
    %v1693 = vsel %vm364, %v1689, %v1680
    %v1694 = vsel %vm364, %v1690, %v1682
    %v1695 = vpack.c.bf16 %v1692, %v1691
    %v1696 = vpack.c.bf16 %v1694, %v1693
    %v1698 = vlaneseq
    %v1699 = vshrl.u32 %v1698, 7
    %v1700 = vsub.s32 0, %v1699
    %v1701 = vrot.slane %v1613, %v1700
    %v1715 = vunpack.c.l.b16 %v1601
    %v1716 = vunpack.c.l.b16 %v1602
    %v1717 = vunpack.c.l.b16 %v1603
    %v1718 = vunpack.c.l.b16 %v1604
    %v1719 = vunpack.c.l.b16 %v1605
    %v1720 = vunpack.c.l.b16 %v1606
    %v1721 = vunpack.c.l.b16 %v1607
    %v1722 = vunpack.c.l.b16 %v1608
    %v1723 = vunpack.c.l.b16 %v1609
    %v1724 = vunpack.c.l.b16 %v1610
    %v1725 = vunpack.c.l.b16 %v1611
    %v1726 = vunpack.c.l.b16 %v1612
    %v1727 = vpack.c.b16 %v1716, %v1715
    %v1728 = vpack.c.b16 %v1718, %v1717
    %v1729 = vpack.c.b16 %v1720, %v1719
    %v1730 = vpack.c.b16 %v1722, %v1721
    %v1731 = vpack.c.b16 %v1724, %v1723
    %v1732 = vpack.c.b16 %v1726, %v1725
    %v1740 = vsel %vm413, %v1695, 0
    %v1743 = vsel %vm413, %v1696, 0
    %1745 = vmatprep.subr.bf16.mxu0 0
    %1746 = vmatpush1.bf16.msra.mxu0 0
    %1747 = vmatprep.subr.bf16.mxu0 0
    %1748 = vmatpush1.bf16.msra.mxu0 0
    %1749 = vmatprep.subr.bf16.mxu0 0
    %1750 = vmatpush1.bf16.msra.mxu0 %v1732
    %1751 = vmatprep.subr.bf16.mxu0 0
    %1752 = vmatpush1.bf16.msra.mxu0 %v1731
    %1753 = vmatprep.subr.bf16.mxu0 0
    %1754 = vmatpush1.bf16.msra.mxu0 %v1730
    %1755 = vmatprep.subr.bf16.mxu0 0
    %1756 = vmatpush1.bf16.msra.mxu0 %v1729
    %1757 = vmatprep.subr.bf16.mxu0 0
    %1758 = vmatpush1.bf16.msra.mxu0 %v1728
    %1759 = vmatprep.subr.bf16.mxu0 0
    %1760 = vmatpush1.bf16.msra.mxu0 %v1727
    %1761 = vmatprep.subr.bf16.mxu0 0
    %1762 = vmatpush2.bf16.msra.mxu0 0
    %1763 = vmatprep.subr.bf16.mxu0 0
    %1764 = vmatpush2.bf16.msra.mxu0 0
    %1765 = vmatprep.subr.bf16.mxu0 0
    %1766 = vmatpush2.bf16.msra.mxu0 0
    %1767 = vmatprep.subr.bf16.mxu0 0
    %1768 = vmatpush2.bf16.msra.mxu0 0
    %1769 = vmatprep.subr.bf16.mxu0 0
    %1770 = vmatpush2.bf16.msra.mxu0 0
    %1771 = vmatprep.subr.bf16.mxu0 0
    %1772 = vmatpush2.bf16.msra.mxu0 0
    %1773 = vmatprep.subr.bf16.mxu0 0
    %1774 = vmatpush2.bf16.msra.mxu0 0
    %1775 = vmatprep.subr.bf16.mxu0 0
    %1776 = vmatpush2.bf16.msra.mxu0 0
    %1777 = vmatprep.mubr.bf16.mxu0 0
    %1778 = vmatmul.mubr.bf16.gmra.mxu0 %v1740
    %v1779 = vpop.f32.mrf.mxu0
    %v1780 = vadd.f32 %v1701, %v1779
    %v1781 = vpop.f32.mrf.mxu0
    %v1782 = vpop.f32.mrf.mxu0
    %v1783 = vadd.f32 %v1701, %v1782
    %v1784 = vpop.f32.mrf.mxu0
    %1785 = vmatprep.mubr.bf16.mxu0 0
    %1786 = vmatmul.mubr.bf16.gmra.mxu0 %v1743
    %v1787 = vpop.f32.mrf.mxu0
    %v1788 = vadd.f32 %v1701, %v1787
    %v1789 = vpop.f32.mrf.mxu0
    %v1790 = vpop.f32.mrf.mxu0
    %v1791 = vadd.f32 %v1701, %v1790
    %v1792 = vpop.f32.mrf.mxu0
    %1793 = vdwg.mxu0
    %v1794 = vtanh.pop %v1780
    %v1795 = vtanh.pop %v1783
    %v1796 = vtanh.pop %v1788
    %v1797 = vtanh.pop %v1791
    %v1798 = vxor.u32 %v1780, 2147483648
    %v1799 = vxor.u32 %v1783, 2147483648
    %v1800 = vxor.u32 %v1788, 2147483648
    %v1801 = vxor.u32 %v1791, 2147483648
    %v1802 = vmul.f32 %v1798, 1.442695
    %v1803 = vpow.pop %v1802
    %v1804 = vmul.f32 %v1799, 1.442695
    %v1805 = vpow.pop %v1804
    %v1806 = vmul.f32 %v1800, 1.442695
    %v1807 = vpow.pop %v1806
    %v1808 = vmul.f32 %v1801, 1.442695
    %v1809 = vpow.pop %v1808
    %v1810 = vadd.f32 %v1803, 1.0
    %v1811 = vadd.f32 %v1805, 1.0
    %v1812 = vadd.f32 %v1807, 1.0
    %v1813 = vadd.f32 %v1809, 1.0
    %v1814 = vrcp.pop %v1810
    %v1815 = vmul.f32 1.0, %v1814
    %v1816 = vrcp.pop %v1811
    %v1817 = vmul.f32 1.0, %v1816
    %v1818 = vrcp.pop %v1812
    %v1819 = vmul.f32 1.0, %v1818
    %v1820 = vrcp.pop %v1813
    %v1821 = vmul.f32 1.0, %v1820
    %1826 = vrot.lane.b32.xlu0 %v1815, 96
    %v1827 = vpop.permute.xlu0 %1826
    %1828 = vrot.lane.b32.xlu0 %v1817, 96
    %v1829 = vpop.permute.xlu0 %1828
    %1830 = vrot.lane.b32.xlu0 %v1819, 96
    %v1831 = vpop.permute.xlu0 %1830
    %1832 = vrot.lane.b32.xlu0 %v1821, 96
    %v1833 = vpop.permute.xlu0 %1832
    %v1838 = vmul.f32 %v1794, %v1827
    %v1839 = vmul.f32 %v1795, %v1829
    %v1840 = vmul.f32 %v1796, %v1831
    %v1841 = vmul.f32 %v1797, %v1833
    %v1842 = vpack.c.bf16 %v1839, %v1838
    %v1843 = vpack.c.bf16 %v1841, %v1840
    %v1845 = vlaneseq
    %v1846 = vshrl.u32 %v1845, 7
    %v1847 = vsub.s32 0, %v1846
    %v1848 = vrot.slane %v1618, %v1847
    %v1854 = vunpack.c.l.b16 %v1614
    %v1855 = vunpack.c.l.b16 %v1615
    %v1856 = vunpack.c.l.b16 %v1616
    %v1857 = vunpack.c.l.b16 %v1617
    %v1858 = vpack.c.b16 %v1855, %v1854
    %v1859 = vpack.c.b16 %v1857, %v1856
    %v1863 = vsel %vm359, %v1842, 0
    %v1866 = vsel %vm359, %v1843, 0
    %1868 = vmatprep.subr.bf16.mxu0 0
    %1869 = vmatpush1.bf16.msra.mxu0 0
    %1870 = vmatprep.subr.bf16.mxu0 0
    %1871 = vmatpush1.bf16.msra.mxu0 0
    %1872 = vmatprep.subr.bf16.mxu0 0
    %1873 = vmatpush1.bf16.msra.mxu0 0
    %1874 = vmatprep.subr.bf16.mxu0 0
    %1875 = vmatpush1.bf16.msra.mxu0 0
    %1876 = vmatprep.subr.bf16.mxu0 0
    %1877 = vmatpush1.bf16.msra.mxu0 0
    %1878 = vmatprep.subr.bf16.mxu0 0
    %1879 = vmatpush1.bf16.msra.mxu0 0
    %1880 = vmatprep.subr.bf16.mxu0 0
    %1881 = vmatpush1.bf16.msra.mxu0 %v1859
    %1882 = vmatprep.subr.bf16.mxu0 0
    %1883 = vmatpush1.bf16.msra.mxu0 %v1858
    %1884 = vmatprep.subr.bf16.mxu0 0
    %1885 = vmatpush2.bf16.msra.mxu0 0
    %1886 = vmatprep.subr.bf16.mxu0 0
    %1887 = vmatpush2.bf16.msra.mxu0 0
    %1888 = vmatprep.subr.bf16.mxu0 0
    %1889 = vmatpush2.bf16.msra.mxu0 0
    %1890 = vmatprep.subr.bf16.mxu0 0
    %1891 = vmatpush2.bf16.msra.mxu0 0
    %1892 = vmatprep.subr.bf16.mxu0 0
    %1893 = vmatpush2.bf16.msra.mxu0 0
    %1894 = vmatprep.subr.bf16.mxu0 0
    %1895 = vmatpush2.bf16.msra.mxu0 0
    %1896 = vmatprep.subr.bf16.mxu0 0
    %1897 = vmatpush2.bf16.msra.mxu0 0
    %1898 = vmatprep.subr.bf16.mxu0 0
    %1899 = vmatpush2.bf16.msra.mxu0 0
    %1900 = vmatprep.mubr.bf16.mxu0 0
    %1901 = vmatmul.mubr.bf16.gmra.mxu0 %v1863
    %v1902 = vpop.f32.mrf.mxu0
    %v1903 = vadd.f32 %v1848, %v1902
    %v1904 = vpop.f32.mrf.mxu0
    %v1905 = vpop.f32.mrf.mxu0
    %v1906 = vadd.f32 %v1848, %v1905
    %v1907 = vpop.f32.mrf.mxu0
    %1908 = vmatprep.mubr.bf16.mxu0 0
    %1909 = vmatmul.mubr.bf16.gmra.mxu0 %v1866
    %v1910 = vpop.f32.mrf.mxu0
    %v1911 = vadd.f32 %v1848, %v1910
    %v1912 = vpop.f32.mrf.mxu0
    %v1913 = vpop.f32.mrf.mxu0
    %v1914 = vadd.f32 %v1848, %v1913
    %v1915 = vpop.f32.mrf.mxu0
    %1916 = vdwg.mxu0
    %v1917 = vadd.f32 %v1593, %v1903
    %v1918 = vadd.f32 %v1594, %v1906
    %v1919 = vadd.f32 %v1595, %v1911
    %v1920 = vadd.f32 %v1596, %v1914
    %v1921 = vadd.f32 %v1903, %v1597
    %v1922 = vadd.f32 %v1906, %v1598
    %v1923 = vadd.f32 %v1911, %v1599
    %v1924 = vadd.f32 %v1914, %v1600
    %v1925 = vld [vmem:[%s47] sm:$0xf]
    %v1926 = vld [vmem:[%s47 + $0x4] sm:$0xf]
    %v1927 = vld [vmem:[%s47 + $0x8] sm:$0xf]
    %v1928 = vld [vmem:[%s47 + $0xc] sm:$0xf]
    %v1929 = vld [vmem:[%s47 + $0x10] sm:$0xf]
    %v1930 = vld [vmem:[%s47 + $0x14] sm:$0xf]
    %v1931 = vld [vmem:[%s47 + $0x18] sm:$0xf]
    %v1932 = vld [vmem:[%s47 + $0x1c] sm:$0xf]
    %v1933 = vld [vmem:[%s47 + $0x20] sm:$0xf]
    %v1934 = vld [vmem:[%s47 + $0x24] sm:$0xf]
    %v1935 = vld [vmem:[%s47 + $0x28] sm:$0xf]
    %v1936 = vld [vmem:[%s47 + $0x2c] sm:$0xf]
    %v1937 = vld [vmem:[%s49] sm:$0x1]
    %v1938 = vld [vmem:[%s51] sm:$0xf]
    %v1939 = vld [vmem:[%s51 + $0x4] sm:$0xf]
    %v1940 = vld [vmem:[%s51 + $0x8] sm:$0xf]
    %v1941 = vld [vmem:[%s51 + $0xc] sm:$0xf]
    %v1942 = vld [vmem:[%s53] sm:$0x1]
    %1947 = vrot.lane.b32.xlu0 %v1921, 96
    %v1948 = vpop.permute.xlu0 %1947
    %1949 = vrot.lane.b32.xlu0 %v1922, 96
    %v1950 = vpop.permute.xlu0 %1949
    %1951 = vrot.lane.b32.xlu0 %v1923, 96
    %v1952 = vpop.permute.xlu0 %1951
    %1953 = vrot.lane.b32.xlu0 %v1924, 96
    %v1954 = vpop.permute.xlu0 %1953
    %v1959 = vsel %vm991, %v1954, 0.0
    %v1960 = vsel %vm992, %v1948, 0.0
    %v1961 = vsel %vm993, %v1950, 0.0
    %v1962 = vsel %vm994, %v1952, 0.0
    %v1963 = vrot.slane %v1948, 4
    %v1964 = vrot.slane %v1950, 4
    %v1965 = vrot.slane %v1952, 4
    %v1966 = vrot.slane %v1954, 4
    %v1967 = vsel %vm650, %v1965, %v1966
    %v1968 = vsel %vm650, %v1964, %v1965
    %v1969 = vsel %vm650, %v1963, %v1964
    %v1970 = vsel %vm650, %v1966, %v1963
    %v1971 = vsel %vm663, %v1970, 0.0
    %v1972 = vsel %vm664, %v1969, 0.0
    %v1973 = vsel %vm665, %v1968, 0.0
    %v1974 = vsel %vm666, %v1967, 0.0
    %1979 = vrot.lane.b32.xlu0 %v1971, 32
    %v1980 = vpop.permute.xlu0 %1979
    %1981 = vrot.lane.b32.xlu0 %v1972, 32
    %v1982 = vpop.permute.xlu0 %1981
    %1983 = vrot.lane.b32.xlu0 %v1973, 32
    %v1984 = vpop.permute.xlu0 %1983
    %1985 = vrot.lane.b32.xlu0 %v1974, 32
    %v1986 = vpop.permute.xlu0 %1985
    %1991 = vrot.lane.b32.xlu0 %v1921, 32
    %v1992 = vpop.permute.xlu0 %1991
    %1993 = vrot.lane.b32.xlu0 %v1922, 32
    %v1994 = vpop.permute.xlu0 %1993
    %1995 = vrot.lane.b32.xlu0 %v1923, 32
    %v1996 = vpop.permute.xlu0 %1995
    %1997 = vrot.lane.b32.xlu0 %v1924, 32
    %v1998 = vpop.permute.xlu0 %1997
    %v2003 = vsel %vm359, %v1959, %v1980
    %v2004 = vsel %vm359, %v1960, %v1982
    %v2005 = vsel %vm359, %v1961, %v1984
    %v2006 = vsel %vm359, %v1962, %v1986
    %v2007 = vsel %vm364, %v2003, %v1992
    %v2008 = vsel %vm364, %v2004, %v1994
    %v2009 = vsel %vm364, %v2005, %v1996
    %v2010 = vsel %vm364, %v2006, %v1998
    %v2011 = vpack.c.bf16 %v2008, %v2007
    %v2012 = vpack.c.bf16 %v2010, %v2009
    %v2014 = vlaneseq
    %v2015 = vshrl.u32 %v2014, 7
    %v2016 = vsub.s32 0, %v2015
    %v2017 = vrot.slane %v1937, %v2016
    %v2031 = vunpack.c.l.b16 %v1925
    %v2032 = vunpack.c.l.b16 %v1926
    %v2033 = vunpack.c.l.b16 %v1927
    %v2034 = vunpack.c.l.b16 %v1928
    %v2035 = vunpack.c.l.b16 %v1929
    %v2036 = vunpack.c.l.b16 %v1930
    %v2037 = vunpack.c.l.b16 %v1931
    %v2038 = vunpack.c.l.b16 %v1932
    %v2039 = vunpack.c.l.b16 %v1933
    %v2040 = vunpack.c.l.b16 %v1934
    %v2041 = vunpack.c.l.b16 %v1935
    %v2042 = vunpack.c.l.b16 %v1936
    %v2043 = vpack.c.b16 %v2032, %v2031
    %v2044 = vpack.c.b16 %v2034, %v2033
    %v2045 = vpack.c.b16 %v2036, %v2035
    %v2046 = vpack.c.b16 %v2038, %v2037
    %v2047 = vpack.c.b16 %v2040, %v2039
    %v2048 = vpack.c.b16 %v2042, %v2041
    %v2056 = vsel %vm413, %v2011, 0
    %v2059 = vsel %vm413, %v2012, 0
    %2061 = vmatprep.subr.bf16.mxu0 0
    %2062 = vmatpush1.bf16.msra.mxu0 0
    %2063 = vmatprep.subr.bf16.mxu0 0
    %2064 = vmatpush1.bf16.msra.mxu0 0
    %2065 = vmatprep.subr.bf16.mxu0 0
    %2066 = vmatpush1.bf16.msra.mxu0 %v2048
    %2067 = vmatprep.subr.bf16.mxu0 0
    %2068 = vmatpush1.bf16.msra.mxu0 %v2047
    %2069 = vmatprep.subr.bf16.mxu0 0
    %2070 = vmatpush1.bf16.msra.mxu0 %v2046
    %2071 = vmatprep.subr.bf16.mxu0 0
    %2072 = vmatpush1.bf16.msra.mxu0 %v2045
    %2073 = vmatprep.subr.bf16.mxu0 0
    %2074 = vmatpush1.bf16.msra.mxu0 %v2044
    %2075 = vmatprep.subr.bf16.mxu0 0
    %2076 = vmatpush1.bf16.msra.mxu0 %v2043
    %2077 = vmatprep.subr.bf16.mxu0 0
    %2078 = vmatpush2.bf16.msra.mxu0 0
    %2079 = vmatprep.subr.bf16.mxu0 0
    %2080 = vmatpush2.bf16.msra.mxu0 0
    %2081 = vmatprep.subr.bf16.mxu0 0
    %2082 = vmatpush2.bf16.msra.mxu0 0
    %2083 = vmatprep.subr.bf16.mxu0 0
    %2084 = vmatpush2.bf16.msra.mxu0 0
    %2085 = vmatprep.subr.bf16.mxu0 0
    %2086 = vmatpush2.bf16.msra.mxu0 0
    %2087 = vmatprep.subr.bf16.mxu0 0
    %2088 = vmatpush2.bf16.msra.mxu0 0
    %2089 = vmatprep.subr.bf16.mxu0 0
    %2090 = vmatpush2.bf16.msra.mxu0 0
    %2091 = vmatprep.subr.bf16.mxu0 0
    %2092 = vmatpush2.bf16.msra.mxu0 0
    %2093 = vmatprep.mubr.bf16.mxu0 0
    %2094 = vmatmul.mubr.bf16.gmra.mxu0 %v2056
    %v2095 = vpop.f32.mrf.mxu0
    %v2096 = vadd.f32 %v2017, %v2095
    %v2097 = vpop.f32.mrf.mxu0
    %v2098 = vpop.f32.mrf.mxu0
    %v2099 = vadd.f32 %v2017, %v2098
    %v2100 = vpop.f32.mrf.mxu0
    %2101 = vmatprep.mubr.bf16.mxu0 0
    %2102 = vmatmul.mubr.bf16.gmra.mxu0 %v2059
    %v2103 = vpop.f32.mrf.mxu0
    %v2104 = vadd.f32 %v2017, %v2103
    %v2105 = vpop.f32.mrf.mxu0
    %v2106 = vpop.f32.mrf.mxu0
    %v2107 = vadd.f32 %v2017, %v2106
    %v2108 = vpop.f32.mrf.mxu0
    %2109 = vdwg.mxu0
    %v2110 = vtanh.pop %v2096
    %v2111 = vtanh.pop %v2099
    %v2112 = vtanh.pop %v2104
    %v2113 = vtanh.pop %v2107
    %v2114 = vxor.u32 %v2096, 2147483648
    %v2115 = vxor.u32 %v2099, 2147483648
    %v2116 = vxor.u32 %v2104, 2147483648
    %v2117 = vxor.u32 %v2107, 2147483648
    %v2118 = vmul.f32 %v2114, 1.442695
    %v2119 = vpow.pop %v2118
    %v2120 = vmul.f32 %v2115, 1.442695
    %v2121 = vpow.pop %v2120
    %v2122 = vmul.f32 %v2116, 1.442695
    %v2123 = vpow.pop %v2122
    %v2124 = vmul.f32 %v2117, 1.442695
    %v2125 = vpow.pop %v2124
    %v2126 = vadd.f32 %v2119, 1.0
    %v2127 = vadd.f32 %v2121, 1.0
    %v2128 = vadd.f32 %v2123, 1.0
    %v2129 = vadd.f32 %v2125, 1.0
    %v2130 = vrcp.pop %v2126
    %v2131 = vmul.f32 1.0, %v2130
    %v2132 = vrcp.pop %v2127
    %v2133 = vmul.f32 1.0, %v2132
    %v2134 = vrcp.pop %v2128
    %v2135 = vmul.f32 1.0, %v2134
    %v2136 = vrcp.pop %v2129
    %v2137 = vmul.f32 1.0, %v2136
    %2142 = vrot.lane.b32.xlu0 %v2131, 96
    %v2143 = vpop.permute.xlu0 %2142
    %2144 = vrot.lane.b32.xlu0 %v2133, 96
    %v2145 = vpop.permute.xlu0 %2144
    %2146 = vrot.lane.b32.xlu0 %v2135, 96
    %v2147 = vpop.permute.xlu0 %2146
    %2148 = vrot.lane.b32.xlu0 %v2137, 96
    %v2149 = vpop.permute.xlu0 %2148
    %v2154 = vmul.f32 %v2110, %v2143
    %v2155 = vmul.f32 %v2111, %v2145
    %v2156 = vmul.f32 %v2112, %v2147
    %v2157 = vmul.f32 %v2113, %v2149
    %v2158 = vpack.c.bf16 %v2155, %v2154
    %v2159 = vpack.c.bf16 %v2157, %v2156
    %v2161 = vlaneseq
    %v2162 = vshrl.u32 %v2161, 7
    %v2163 = vsub.s32 0, %v2162
    %v2164 = vrot.slane %v1942, %v2163
    %v2170 = vunpack.c.l.b16 %v1938
    %v2171 = vunpack.c.l.b16 %v1939
    %v2172 = vunpack.c.l.b16 %v1940
    %v2173 = vunpack.c.l.b16 %v1941
    %v2174 = vpack.c.b16 %v2171, %v2170
    %v2175 = vpack.c.b16 %v2173, %v2172
    %v2179 = vsel %vm359, %v2158, 0
    %v2182 = vsel %vm359, %v2159, 0
    %2184 = vmatprep.subr.bf16.mxu0 0
    %2185 = vmatpush1.bf16.msra.mxu0 0
    %2186 = vmatprep.subr.bf16.mxu0 0
    %2187 = vmatpush1.bf16.msra.mxu0 0
    %2188 = vmatprep.subr.bf16.mxu0 0
    %2189 = vmatpush1.bf16.msra.mxu0 0
    %2190 = vmatprep.subr.bf16.mxu0 0
    %2191 = vmatpush1.bf16.msra.mxu0 0
    %2192 = vmatprep.subr.bf16.mxu0 0
    %2193 = vmatpush1.bf16.msra.mxu0 0
    %2194 = vmatprep.subr.bf16.mxu0 0
    %2195 = vmatpush1.bf16.msra.mxu0 0
    %2196 = vmatprep.subr.bf16.mxu0 0
    %2197 = vmatpush1.bf16.msra.mxu0 %v2175
    %2198 = vmatprep.subr.bf16.mxu0 0
    %2199 = vmatpush1.bf16.msra.mxu0 %v2174
    %2200 = vmatprep.subr.bf16.mxu0 0
    %2201 = vmatpush2.bf16.msra.mxu0 0
    %2202 = vmatprep.subr.bf16.mxu0 0
    %2203 = vmatpush2.bf16.msra.mxu0 0
    %2204 = vmatprep.subr.bf16.mxu0 0
    %2205 = vmatpush2.bf16.msra.mxu0 0
    %2206 = vmatprep.subr.bf16.mxu0 0
    %2207 = vmatpush2.bf16.msra.mxu0 0
    %2208 = vmatprep.subr.bf16.mxu0 0
    %2209 = vmatpush2.bf16.msra.mxu0 0
    %2210 = vmatprep.subr.bf16.mxu0 0
    %2211 = vmatpush2.bf16.msra.mxu0 0
    %2212 = vmatprep.subr.bf16.mxu0 0
    %2213 = vmatpush2.bf16.msra.mxu0 0
    %2214 = vmatprep.subr.bf16.mxu0 0
    %2215 = vmatpush2.bf16.msra.mxu0 0
    %2216 = vmatprep.mubr.bf16.mxu0 0
    %2217 = vmatmul.mubr.bf16.gmra.mxu0 %v2179
    %v2218 = vpop.f32.mrf.mxu0
    %v2219 = vadd.f32 %v2164, %v2218
    %v2220 = vpop.f32.mrf.mxu0
    %v2221 = vpop.f32.mrf.mxu0
    %v2222 = vadd.f32 %v2164, %v2221
    %v2223 = vpop.f32.mrf.mxu0
    %2224 = vmatprep.mubr.bf16.mxu0 0
    %2225 = vmatmul.mubr.bf16.gmra.mxu0 %v2182
    %v2226 = vpop.f32.mrf.mxu0
    %v2227 = vadd.f32 %v2164, %v2226
    %v2228 = vpop.f32.mrf.mxu0
    %v2229 = vpop.f32.mrf.mxu0
    %v2230 = vadd.f32 %v2164, %v2229
    %v2231 = vpop.f32.mrf.mxu0
    %2232 = vdwg.mxu0
    %v2233 = vadd.f32 %v1917, %v2219
    %v2234 = vadd.f32 %v1918, %v2222
    %v2235 = vadd.f32 %v1919, %v2227
    %v2236 = vadd.f32 %v1920, %v2230
    %v2237 = vld [vmem:[%s55] sm:$0xf]
    %v2238 = vld [vmem:[%s55 + $0x4] sm:$0xf]
    %v2239 = vld [vmem:[%s55 + $0x8] sm:$0xf]
    %v2240 = vld [vmem:[%s55 + $0xc] sm:$0xf]
    %v2241 = vld [vmem:[%s57] sm:$0x1]
    %v2242 = vmax.f32 %v2233, 0.0
    %v2243 = vmax.f32 %v2234, 0.0
    %v2244 = vmax.f32 %v2235, 0.0
    %v2245 = vmax.f32 %v2236, 0.0
    %v2246 = vpack.c.bf16 %v2243, %v2242
    %v2247 = vpack.c.bf16 %v2245, %v2244
    %v2249 = vlaneseq
    %v2250 = vshrl.u32 %v2249, 7
    %v2251 = vsub.s32 0, %v2250
    %v2252 = vrot.slane %v2241, %v2251
    %v2258 = vunpack.c.l.b16 %v2237
    %v2259 = vunpack.c.l.b16 %v2238
    %v2260 = vunpack.c.l.b16 %v2239
    %v2261 = vunpack.c.l.b16 %v2240
    %v2262 = vpack.c.b16 %v2259, %v2258
    %v2263 = vpack.c.b16 %v2261, %v2260
    %v2267 = vsel %vm359, %v2246, 0
    %v2270 = vsel %vm359, %v2247, 0
    %2272 = vmatprep.subr.bf16.mxu0 0
    %2273 = vmatpush1.bf16.msra.mxu0 0
    %2274 = vmatprep.subr.bf16.mxu0 0
    %2275 = vmatpush1.bf16.msra.mxu0 0
    %2276 = vmatprep.subr.bf16.mxu0 0
    %2277 = vmatpush1.bf16.msra.mxu0 0
    %2278 = vmatprep.subr.bf16.mxu0 0
    %2279 = vmatpush1.bf16.msra.mxu0 0
    %2280 = vmatprep.subr.bf16.mxu0 0
    %2281 = vmatpush1.bf16.msra.mxu0 0
    %2282 = vmatprep.subr.bf16.mxu0 0
    %2283 = vmatpush1.bf16.msra.mxu0 0
    %2284 = vmatprep.subr.bf16.mxu0 0
    %2285 = vmatpush1.bf16.msra.mxu0 %v2263
    %2286 = vmatprep.subr.bf16.mxu0 0
    %2287 = vmatpush1.bf16.msra.mxu0 %v2262
    %2288 = vmatprep.subr.bf16.mxu0 0
    %2289 = vmatpush2.bf16.msra.mxu0 0
    %2290 = vmatprep.subr.bf16.mxu0 0
    %2291 = vmatpush2.bf16.msra.mxu0 0
    %2292 = vmatprep.subr.bf16.mxu0 0
    %2293 = vmatpush2.bf16.msra.mxu0 0
    %2294 = vmatprep.subr.bf16.mxu0 0
    %2295 = vmatpush2.bf16.msra.mxu0 0
    %2296 = vmatprep.subr.bf16.mxu0 0
    %2297 = vmatpush2.bf16.msra.mxu0 0
    %2298 = vmatprep.subr.bf16.mxu0 0
    %2299 = vmatpush2.bf16.msra.mxu0 0
    %2300 = vmatprep.subr.bf16.mxu0 0
    %2301 = vmatpush2.bf16.msra.mxu0 0
    %2302 = vmatprep.subr.bf16.mxu0 0
    %2303 = vmatpush2.bf16.msra.mxu0 0
    %2304 = vmatprep.mubr.bf16.mxu0 0
    %2305 = vmatmul.mubr.bf16.gmra.mxu0 %v2267
    %v2306 = vpop.f32.mrf.mxu0
    %v2307 = vadd.f32 %v2252, %v2306
    %v2308 = vpop.f32.mrf.mxu0
    %v2309 = vpop.f32.mrf.mxu0
    %v2310 = vadd.f32 %v2252, %v2309
    %v2311 = vpop.f32.mrf.mxu0
    %2312 = vmatprep.mubr.bf16.mxu0 0
    %2313 = vmatmul.mubr.bf16.gmra.mxu0 %v2270
    %v2314 = vpop.f32.mrf.mxu0
    %v2315 = vadd.f32 %v2252, %v2314
    %v2316 = vpop.f32.mrf.mxu0
    %v2317 = vpop.f32.mrf.mxu0
    %v2318 = vadd.f32 %v2252, %v2317
    %v2319 = vpop.f32.mrf.mxu0
    %2320 = vdwg.mxu0
    %v2321 = vld [vmem:[%s59] sm:$0xf]
    %v2322 = vld [vmem:[%s59 + $0x4] sm:$0xf]
    %v2323 = vld [vmem:[%s59 + $0x8] sm:$0xf]
    %v2324 = vld [vmem:[%s59 + $0xc] sm:$0xf]
    %v2325 = vld [vmem:[%s61] sm:$0x1]
    %v2326 = vmax.f32 %v2307, 0.0
    %v2327 = vmax.f32 %v2310, 0.0
    %v2328 = vmax.f32 %v2315, 0.0
    %v2329 = vmax.f32 %v2318, 0.0
    %v2330 = vpack.c.bf16 %v2327, %v2326
    %v2331 = vpack.c.bf16 %v2329, %v2328
    %v2333 = vlaneseq
    %v2334 = vshrl.u32 %v2333, 7
    %v2335 = vsub.s32 0, %v2334
    %v2336 = vrot.slane %v2325, %v2335
    %v2342 = vunpack.c.l.b16 %v2321
    %v2343 = vunpack.c.l.b16 %v2322
    %v2344 = vunpack.c.l.b16 %v2323
    %v2345 = vunpack.c.l.b16 %v2324
    %v2346 = vpack.c.b16 %v2343, %v2342
    %v2347 = vpack.c.b16 %v2345, %v2344
    %v2351 = vsel %vm359, %v2330, 0
    %v2354 = vsel %vm359, %v2331, 0
    %2356 = vmatprep.subr.bf16.mxu0 0
    %2357 = vmatpush1.bf16.msra.mxu0 0
    %2358 = vmatprep.subr.bf16.mxu0 0
    %2359 = vmatpush1.bf16.msra.mxu0 0
    %2360 = vmatprep.subr.bf16.mxu0 0
    %2361 = vmatpush1.bf16.msra.mxu0 0
    %2362 = vmatprep.subr.bf16.mxu0 0
    %2363 = vmatpush1.bf16.msra.mxu0 0
    %2364 = vmatprep.subr.bf16.mxu0 0
    %2365 = vmatpush1.bf16.msra.mxu0 0
    %2366 = vmatprep.subr.bf16.mxu0 0
    %2367 = vmatpush1.bf16.msra.mxu0 0
    %2368 = vmatprep.subr.bf16.mxu0 0
    %2369 = vmatpush1.bf16.msra.mxu0 %v2347
    %2370 = vmatprep.subr.bf16.mxu0 0
    %2371 = vmatpush1.bf16.msra.mxu0 %v2346
    %2372 = vmatprep.subr.bf16.mxu0 0
    %2373 = vmatpush2.bf16.msra.mxu0 0
    %2374 = vmatprep.subr.bf16.mxu0 0
    %2375 = vmatpush2.bf16.msra.mxu0 0
    %2376 = vmatprep.subr.bf16.mxu0 0
    %2377 = vmatpush2.bf16.msra.mxu0 0
    %2378 = vmatprep.subr.bf16.mxu0 0
    %2379 = vmatpush2.bf16.msra.mxu0 0
    %2380 = vmatprep.subr.bf16.mxu0 0
    %2381 = vmatpush2.bf16.msra.mxu0 0
    %2382 = vmatprep.subr.bf16.mxu0 0
    %2383 = vmatpush2.bf16.msra.mxu0 0
    %2384 = vmatprep.subr.bf16.mxu0 0
    %2385 = vmatpush2.bf16.msra.mxu0 0
    %2386 = vmatprep.subr.bf16.mxu0 0
    %2387 = vmatpush2.bf16.msra.mxu0 0
    %2388 = vmatprep.mubr.bf16.mxu0 0
    %2389 = vmatmul.mubr.bf16.gmra.mxu0 %v2351
    %v2390 = vpop.f32.mrf.mxu0
    %v2391 = vadd.f32 %v2336, %v2390
    %v2392 = vpop.f32.mrf.mxu0
    %v2393 = vpop.f32.mrf.mxu0
    %v2394 = vadd.f32 %v2336, %v2393
    %v2395 = vpop.f32.mrf.mxu0
    %2396 = vmatprep.mubr.bf16.mxu0 0
    %2397 = vmatmul.mubr.bf16.gmra.mxu0 %v2354
    %v2398 = vpop.f32.mrf.mxu0
    %v2399 = vadd.f32 %v2336, %v2398
    %v2400 = vpop.f32.mrf.mxu0
    %v2401 = vpop.f32.mrf.mxu0
    %v2402 = vadd.f32 %v2336, %v2401
    %v2403 = vpop.f32.mrf.mxu0
    %2404 = vdwg.mxu0
    %2405 = vst [vmem:[#allocation2] sm:$0xff] %v2391
    %2406 = vst [vmem:[#allocation2 + $0x8] sm:$0xff] %v2394
    %2407 = vst [vmem:[#allocation2 + $0x10] sm:$0xff] %v2399
    %2408 = vst [vmem:[#allocation2 + $0x18] sm:$0xff] %v2402
    // Predicated region
    $region126: #{tpu_custom_call.1} parent=1 // pred_check
      _
    $region127: #{tpu_custom_call.1} parent=1 // pred_check_branch
      %2410 = sbr.rel (0) target = $region129
    $region128: #{tpu_custom_call.1} parent=1 // pred_region
      %s2412 = ssub.s32 512, 512
      %2413 = vsyncadd [#allocation3], %s2412
      %s2414 = sshll.u32 [#allocation2], 4
      %s2415 = int_to_ptr.vmem [resolvable:$true] %s2414
      %2420 = dma.vmem_to_hbm [thread:$0]  %s2415, 512, %s63, [#allocation3], 128, 128, 8
    $region129: #{tpu_custom_call.1} parent=1 // pred_fallthru
      _
    // Predicated region
    $region130: #{tpu_custom_call.1} parent=1 // pred_check
      _
    $region131: #{tpu_custom_call.1} parent=1 // pred_check_branch
      %2422 = sbr.rel (0) target = $region133
    $region132: #{tpu_custom_call.1} parent=1 // pred_region
      %2423 = dma.done [#allocation3], 512
    $region133: #{tpu_custom_call.1} parent=1 // pred_fallthru
      _
    %2424 = vsyncpa [#allocation3], 1

</llo_original>
